<compile_context>
chip_gen: v6e
topology: v6e:2x2x1
jax: 0.10.0
libtpu: 0.0.40
codegen_flags: <defaults>
</compile_context>

<pallas_src>
import jax
import jax.numpy as jnp
from jax.experimental import pallas as pl
from jax.experimental.pallas import tpu as pltpu


def _linear_kernel(x_ref, w_ref, b_ref, o_ref):
    """One (N-block, K-block) grid step: o += x_tile @ w_tile, bias init at k==0."""
    k = pl.program_id(1)

    @pl.when(k == 0)
    def _():
        # Output block is resident across the K axis; seed it with the bias.
        o_ref[...] = jnp.broadcast_to(b_ref[...], o_ref.shape).astype(o_ref.dtype)

    o_ref[...] += jnp.dot(
        x_ref[...], w_ref[...], preferred_element_type=jnp.float32
    )


def classifier_forward(x, w_t, b, *, tk=2048, tn=512):
    """logits = x @ w_t + b  via a Pallas kernel.

    x   : (B, K)   float32
    w_t : (K, N)   float32   (PyTorch weight transposed)
    b   : (N,)     float32
    """
    B, K = x.shape
    Kw, N = w_t.shape
    assert K == Kw
    assert K % tk == 0, "tk must divide in_features"
    assert tn % 128 == 0, "tn must be a multiple of 128 (lane width)"

    # Pad the class dimension to a multiple of tn (lane-dense, enables N tiling).
    n_pad = ((N + tn - 1) // tn) * tn
    if n_pad != N:
        w_t = jnp.pad(w_t, ((0, 0), (0, n_pad - N)))
        b = jnp.pad(b, (0, n_pad - N))

    b2 = b.reshape(1, n_pad)  # broadcastable bias row

    out = pl.pallas_call(
        _linear_kernel,
        out_shape=jax.ShapeDtypeStruct((B, n_pad), x.dtype),
        grid_spec=pltpu.PrefetchScalarGridSpec(
            num_scalar_prefetch=0,
            # N axis first (parallel -> megacore sharding on v7x),
            # K reduction axis last.
            grid=(n_pad // tn, K // tk),
            in_specs=[
                pl.BlockSpec((B, tk), lambda n, k: (0, k)),    # x tile over K
                pl.BlockSpec((tk, tn), lambda n, k: (k, n)),   # w_t tile over (K, N)
                pl.BlockSpec((1, tn), lambda n, k: (0, n)),    # bias tile over N
            ],
            out_specs=pl.BlockSpec((B, tn), lambda n, k: (0, n)),  # resident over K
        ),
        compiler_params=pltpu.CompilerParams(
            dimension_semantics=("parallel", "arbitrary"),
        ),
    )(x, w_t, b2)

    return out[:, :N]


if __name__ == "__main__":
    NUM_CLASSES = 1000
    IN_FEATURES = 2048
    BATCH = 4

    key = jax.random.PRNGKey(0)
    kx, kw, kb = jax.random.split(key, 3)

    # Deterministic synthetic parameters (shapes match nn.Linear(2048, 1000)).
    x = jax.random.normal(kx, (BATCH, IN_FEATURES), dtype=jnp.float32)
    w = jax.random.normal(kw, (NUM_CLASSES, IN_FEATURES), dtype=jnp.float32) * 0.02
    b = jax.random.normal(kb, (NUM_CLASSES,), dtype=jnp.float32) * 0.02

    w_t = w.T  # (IN_FEATURES, NUM_CLASSES)

    logits = classifier_forward(x, w_t, b)
    jax.block_until_ready(logits)

    # Reference check against plain JAX (same math as PyTorch nn.Linear).
    ref = x @ w_t + b
    assert logits.shape == (BATCH, NUM_CLASSES)
    assert jnp.allclose(logits, ref, atol=1e-3, rtol=1e-3)

    print("KERNEL_OK")
</pallas_src>

<mosaic_0001>
module attributes {stable_mosaic.version = 11 : i64} {
  func.func @_linear_kernel(%arg0: i32, %arg1: i32, %arg2: memref<4x2048xf32, #tpu.memory_space<vmem>>, %arg3: memref<2048x512xf32, #tpu.memory_space<vmem>>, %arg4: memref<1x512xf32, #tpu.memory_space<vmem>>, %arg5: memref<4x512xf32, #tpu.memory_space<vmem>>) attributes {dimension_semantics = [#tpu.dimension_semantics<parallel>, #tpu.dimension_semantics<arbitrary>], iteration_bounds = array<i64: 2, 1>, scalar_prefetch = 0 : i64, scratch_operands = 0 : i64, tpu.core_type = #tpu.core_type<tc>, window_params = [{transform_indices = @transform_0, window_bounds = array<i64: 4, 2048>}, {transform_indices = @transform_1, window_bounds = array<i64: 2048, 512>}, {transform_indices = @transform_2, window_bounds = array<i64: 1, 512>}, {transform_indices = @transform_3, window_bounds = array<i64: 4, 512>}]} {
    %c0_i32 = arith.constant 0 : i32
    %0 = arith.cmpi eq, %arg1, %c0_i32 : i32
    %1 = arith.extui %0 : i1 to i32
    %c0_i32_0 = arith.constant 0 : i32
    %2 = arith.cmpi ne, %1, %c0_i32_0 : i32
    scf.if %2 {
      %c0_8 = arith.constant 0 : index
      %c0_9 = arith.constant 0 : index
      %9 = vector.load %arg4[%c0_8, %c0_9] : memref<1x512xf32, #tpu.memory_space<vmem>>, vector<1x512xf32>
      %10 = vector.shape_cast %9 : vector<1x512xf32> to vector<1x512xf32>
      %11 = vector.broadcast %10 : vector<1x512xf32> to vector<4x512xf32>
      %c0_10 = arith.constant 0 : index
      %c0_11 = arith.constant 0 : index
      %12 = vector.load %arg5[%c0_10, %c0_11] : memref<4x512xf32, #tpu.memory_space<vmem>>, vector<4x512xf32>
      tpu.vector_store %arg5[%c0_10, %c0_11], %11 {strides = array<i32>} : memref<4x512xf32, #tpu.memory_space<vmem>>, vector<4x512xf32>,
    } else {
    }
    %c0 = arith.constant 0 : index
    %c0_1 = arith.constant 0 : index
    %3 = vector.load %arg5[%c0, %c0_1] : memref<4x512xf32, #tpu.memory_space<vmem>>, vector<4x512xf32>
    %c0_2 = arith.constant 0 : index
    %c0_3 = arith.constant 0 : index
    %4 = vector.load %arg2[%c0_2, %c0_3] : memref<4x2048xf32, #tpu.memory_space<vmem>>, vector<4x2048xf32>
    %c0_4 = arith.constant 0 : index
    %c0_5 = arith.constant 0 : index
    %5 = vector.load %arg3[%c0_4, %c0_5] : memref<2048x512xf32, #tpu.memory_space<vmem>>, vector<2048x512xf32>
    %cst = arith.constant dense<0.000000e+00> : vector<4x512xf32>
    %6 = tpu.matmul %4, %5, %cst {dimension_numbers = #tpu.dot_dimension_numbers<[1], [0], [0], [1], [0, 0, 1, 1], [], []>} : vector<4x2048xf32>, vector<2048x512xf32>, vector<4x512xf32> -> vector<4x512xf32>
    %7 = arith.addf %3, %6 : vector<4x512xf32>
    %c0_6 = arith.constant 0 : index
    %c0_7 = arith.constant 0 : index
    %8 = vector.load %arg5[%c0_6, %c0_7] : memref<4x512xf32, #tpu.memory_space<vmem>>, vector<4x512xf32>
    tpu.vector_store %arg5[%c0_6, %c0_7], %7 {strides = array<i32>} : memref<4x512xf32, #tpu.memory_space<vmem>>, vector<4x512xf32>,
    return
  }
  func.func @transform_0(%arg0: i32, %arg1: i32) -> (i32, i32) {
    %c0_i32 = arith.constant 0 : i32
    %c0_i32_0 = arith.constant 0 : i32
    return %c0_i32, %arg1 : i32, i32
  }
  func.func @transform_1(%arg0: i32, %arg1: i32) -> (i32, i32) {
    %c0_i32 = arith.constant 0 : i32
    return %arg1, %arg0 : i32, i32
  }
  func.func @transform_2(%arg0: i32, %arg1: i32) -> (i32, i32) {
    %c0_i32 = arith.constant 0 : i32
    %c0_i32_0 = arith.constant 0 : i32
    return %c0_i32, %arg0 : i32, i32
  }
  func.func @transform_3(%arg0: i32, %arg1: i32) -> (i32, i32) {
    %c0_i32 = arith.constant 0 : i32
    %c0_i32_0 = arith.constant 0 : i32
    return %c0_i32, %arg0 : i32, i32
  }
}

</mosaic_0001>

<llo_original>
// kernel: tpu_custom_call.1
$region0: #{tpu_custom_call.1}
  #allocation0 [shape = 'u32[]', space=smem, size = 0x4, offset = 0x4, fixed_abs, tag = 'smem constant byte address 0x4 - core index']
  #allocation1 [shape = 'u32[144,128]{1,0:T(1,128)}', space=vmem, size = 0x12000, scoped, tag = 'internal scratch']
  %s0 = inlined_call_operand.hbm [shape: f32[4,2048], index: 0, kind: input, shape index: {}]
  %s1 = inlined_call_operand.hbm [shape: f32[2048,1024], index: 1, kind: input, shape index: {}]
  %s2 = inlined_call_operand.hbm [shape: f32[1,1024], index: 2, kind: input, shape index: {}]
  %s3 = inlined_call_operand.hbm [shape: f32[4,1024], index: 3, kind: output, shape index: {}]
  %s4 = sld [smem:[#allocation0]]
  $region61: #{tpu_custom_call.1} parent=0
    _
  %s6 = ssub.s32 1, %s4
  %s7 = scalar_select 0, %s6, %s4
  $region1: #{tpu_custom_call.1} parent=0
    #allocation2 [shape = 'u8[32768]{0}', space=vmem, size = 0x8000, scoped, tag = 'input window, operand 0, single buffered']
    #allocation3 [shape = 's32[2]{0}', space=sflag, size = 0x8, scoped, tag = 'scoped memory for tpu_custom_call.1']
    #allocation4 [shape = 's32[2]{0}', space=sflag, size = 0x8, scoped, tag = 'scoped memory for tpu_custom_call.1']
    #allocation5 [shape = 'u8[8388608]{0}', space=vmem, size = 0x800000, scoped, tag = 'input window, operand 1']
    #allocation6 [shape = 's32[2]{0}', space=sflag, size = 0x8, scoped, tag = 'scoped memory for tpu_custom_call.1']
    #allocation7 [shape = 'u8[4096]{0}', space=vmem, size = 0x1000, scoped, tag = 'input window, operand 2']
    #allocation8 [shape = 'u8[16384]{0}', space=vmem, size = 0x4000, scoped, tag = 'output window, operand 0']
    %8 = vsyncpa [#allocation3], 0
    %9 = vsyncpa [#allocation6], 0
    %s10 = scalar_lea.sflag [#allocation6], 1
    %11 = vsyncpa %s10, 0
    %12 = vsyncpa [#allocation4], 0
    %s13 = scalar_lea.sflag [#allocation4], 1
    %14 = vsyncpa %s13, 0
    loop: start=0, step=1, limit=4
    $region2: #{tpu_custom_call.1} parent=1 // loop_pre_header
      _
    $region3: #{tpu_custom_call.1} parent=1 // loop_header
      %s16 = sphi 0, %s20
      %p17 = scmp.ge.s32.totalorder %s16, 4
      %s23 = sphi 0, %s35
      %s24 = sphi 0, %s31
      %s25 = sphi 0, %s23
      %s26 = sphi 0, %s24
      %s27 = sphi 0, %s25
      %s28 = sphi 0, %s26
      %s38 = sphi 0, %s40
      %s41 = sphi 0, %s38
      %s42 = sphi 0, %s41
      %s58 = sphi 0, %s42
      %s66 = sphi 0, %s68
      %s69 = sphi 0, %s66
      %s70 = sphi 0, %s69
      %s86 = sphi 0, %s70
      %s92 = sphi 0, %s94
      %s95 = sphi 0, %s92
      %s96 = sphi 0, %s95
      %s112 = sphi 0, %s96
      %s118 = sphi 0, %s120
      %s121 = sphi 0, %s118
      %s122 = sphi 0, %s121
      %s138 = sphi 0, %s122
    $region4: #{tpu_custom_call.1} parent=1 // loop_header_branch
      %19 = sbr.rel (%p17) target = $region8
    $region5: #{tpu_custom_call.1} parent=1 // loop_body
      %s21 = ssub.s32 %s16, 1
      %s22 = ssub.s32 %s16, 2
      %s29 = sadd.s32 1, %s24
      %p30 = scmp.ge.s32.totalorder %s29, 1
      %s31 = scalar_select %p30, 0, %s29
      %s32 = sadd.s32 1, %s23
      %s33 = scalar_select %p30, %s32, %s23
      %p34 = scmp.ge.s32.totalorder %s33, 2
      %s35 = scalar_select %p34, 0, %s33
      %s36 = ssub.s32 %s24, %s31
      %p37 = scmp.eq.s32.totalorder %s36, 0
      %s39 = sadd.s32 %s38, 1
      %s40 = scalar_select %p37, %s38, %s39
      %p43 = pneg %p37
      %p44 = scmp.eq.s32.totalorder %s16, 1
      %p45 = por %p43, %p44
      %p46 = scmp.ne.s32.totalorder %s38, %s41
      %p47 = scmp.eq.s32.totalorder %s16, 0
      %p48 = por %p46, %p47
      %p49 = scmp.ne.s32.totalorder %s38, %s41
      %p50 = scmp.eq.s32.totalorder %s21, 1
      %p51 = por %p49, %p50
      %p52 = scmp.ne.s32.totalorder %s41, %s42
      %p53 = scmp.eq.s32.totalorder %s21, 0
      %p54 = por %p52, %p53
      %p55 = scmp.ne.s32.totalorder %s41, %s42
      %p56 = scmp.eq.s32.totalorder %s22, 1
      %p57 = por %p55, %p56
      %p59 = scmp.ne.s32.totalorder %s42, %s58
      %p60 = scmp.eq.s32.totalorder %s22, 0
      %p61 = por %p59, %p60
      %s62 = ssub.s32 %s24, %s31
      %s63 = ssub.s32 %s23, %s35
      %s64 = sor.u32 %s62, %s63
      %p65 = scmp.eq.s32.totalorder %s64, 0
      %s67 = sadd.s32 %s66, 1
      %s68 = scalar_select %p65, %s66, %s67
      %p71 = pneg %p65
      %p72 = scmp.eq.s32.totalorder %s16, 1
      %p73 = por %p71, %p72
      %p74 = scmp.ne.s32.totalorder %s66, %s69
      %p75 = scmp.eq.s32.totalorder %s16, 0
      %p76 = por %p74, %p75
      %p77 = scmp.ne.s32.totalorder %s66, %s69
      %p78 = scmp.eq.s32.totalorder %s21, 1
      %p79 = por %p77, %p78
      %p80 = scmp.ne.s32.totalorder %s69, %s70
      %p81 = scmp.eq.s32.totalorder %s21, 0
      %p82 = por %p80, %p81
      %p83 = scmp.ne.s32.totalorder %s69, %s70
      %p84 = scmp.eq.s32.totalorder %s22, 1
      %p85 = por %p83, %p84
      %p87 = scmp.ne.s32.totalorder %s70, %s86
      %p88 = scmp.eq.s32.totalorder %s22, 0
      %p89 = por %p87, %p88
      %s90 = ssub.s32 %s23, %s35
      %p91 = scmp.eq.s32.totalorder %s90, 0
      %s93 = sadd.s32 %s92, 1
      %s94 = scalar_select %p91, %s92, %s93
      %p97 = pneg %p91
      %p98 = scmp.eq.s32.totalorder %s16, 1
      %p99 = por %p97, %p98
      %p100 = scmp.ne.s32.totalorder %s92, %s95
      %p101 = scmp.eq.s32.totalorder %s16, 0
      %p102 = por %p100, %p101
      %p103 = scmp.ne.s32.totalorder %s92, %s95
      %p104 = scmp.eq.s32.totalorder %s21, 1
      %p105 = por %p103, %p104
      %p106 = scmp.ne.s32.totalorder %s95, %s96
      %p107 = scmp.eq.s32.totalorder %s21, 0
      %p108 = por %p106, %p107
      %p109 = scmp.ne.s32.totalorder %s95, %s96
      %p110 = scmp.eq.s32.totalorder %s22, 1
      %p111 = por %p109, %p110
      %p113 = scmp.ne.s32.totalorder %s96, %s112
      %p114 = scmp.eq.s32.totalorder %s22, 0
      %p115 = por %p113, %p114
      %s116 = ssub.s32 %s23, %s35
      %p117 = scmp.eq.s32.totalorder %s116, 0
      %s119 = sadd.s32 %s118, 1
      %s120 = scalar_select %p117, %s118, %s119
      %p123 = pneg %p117
      %p124 = scmp.eq.s32.totalorder %s16, 1
      %p125 = por %p123, %p124
      %p126 = scmp.ne.s32.totalorder %s118, %s121
      %p127 = scmp.eq.s32.totalorder %s16, 0
      %p128 = por %p126, %p127
      %p129 = scmp.ne.s32.totalorder %s118, %s121
      %p130 = scmp.eq.s32.totalorder %s21, 1
      %p131 = por %p129, %p130
      %p132 = scmp.ne.s32.totalorder %s121, %s122
      %p133 = scmp.eq.s32.totalorder %s21, 0
      %p134 = por %p132, %p133
      %p135 = scmp.ne.s32.totalorder %s121, %s122
      %p136 = scmp.eq.s32.totalorder %s22, 1
      %p137 = por %p135, %p136
      %p139 = scmp.ne.s32.totalorder %s122, %s138
      %p140 = scmp.eq.s32.totalorder %s22, 0
      %p141 = por %p139, %p140
      %p142 = scmp.le.s32.totalorder 1, %s16
      %p143 = scmp.lt.s32.totalorder %s16, 3
      %p144 = pnand %p142, %p143
      %p145 = pneg %p144
      // Predicated region
      $region9: #{tpu_custom_call.1} parent=5 // pred_check
        _
      $region10: #{tpu_custom_call.1} parent=5 // pred_check_branch
        %147 = sbr.rel (%p144) target = $region12
      $region11: #{tpu_custom_call.1} parent=5 // pred_region
        %s148 = ssub.s32 %s16, 1
        // Predicated region
        $region13: #{tpu_custom_call.1} parent=11 // pred_check
          %p149 = pneg %p54
        $region14: #{tpu_custom_call.1} parent=11 // pred_check_branch
          %151 = sbr.rel (%p149) target = $region16
        $region15: #{tpu_custom_call.1} parent=11 // pred_region
          %s152 = smul.u32 16, %s26
          %s154 = ssub.s32 1024, 1024
          %155 = vsyncadd [#allocation3], %s154
          %s156 = smul.addr %s152, 64
          %s157 = scalar_lea.hbm %s0, %s156
          %s159 = sshll.u32 [#allocation2], 4
          %s160 = int_to_ptr.vmem [resolvable:$true] %s159
          %162 = dma.hbm_to_vmem [thread:$0]  %s157, 1024, %s160, [#allocation3]
        $region16: #{tpu_custom_call.1} parent=11 // pred_fallthru
          _
      $region12: #{tpu_custom_call.1} parent=5 // pred_fallthru
        _
      %p163 = scmp.lt.s32.totalorder %s16, 2
      // Predicated region
      $region17: #{tpu_custom_call.1} parent=5 // pred_check
        %p164 = pneg %p163
      $region18: #{tpu_custom_call.1} parent=5 // pred_check_branch
        %166 = sbr.rel (%p164) target = $region20
      $region19: #{tpu_custom_call.1} parent=5 // pred_region
        // Predicated region
        $region21: #{tpu_custom_call.1} parent=19 // pred_check
          %p167 = pneg %p76
        $region22: #{tpu_custom_call.1} parent=19 // pred_check_branch
          %169 = sbr.rel (%p167) target = $region24
        $region23: #{tpu_custom_call.1} parent=19 // pred_region
          %s170 = sand.u32 %s16, 1
          %s171 = scalar_lea.sflag [#allocation6], %s170
          %s172 = sand.u32 %s66, 1
          %s173 = smul.addr %s172, 8192
          %s174 = scalar_lea.vmem [#allocation5], %s173
          %s175 = smul.u32 256, %s24
          %s176 = smul.u32 4, %s23
          %s178 = ssub.s32 131072, 131072
          %179 = vsyncadd %s171, %s178
          %s180 = smul.addr %s175, 8
          %s181 = sadd.s32 %s176, %s180
          %s182 = smul.addr %s181, 128
          %s183 = scalar_lea.hbm %s1, %s182
          %s184 = sshll.u32 %s174, 4
          %s185 = int_to_ptr.vmem [resolvable:$true] %s184
          %190 = dma.hbm_to_vmem [thread:$0]  %s183, 131072, %s185, %s171, 1024, 512, 32
        $region24: #{tpu_custom_call.1} parent=19 // pred_fallthru
          _
        // Predicated region
        $region25: #{tpu_custom_call.1} parent=19 // pred_check
          %p191 = pneg %p102
        $region26: #{tpu_custom_call.1} parent=19 // pred_check_branch
          %193 = sbr.rel (%p191) target = $region28
        $region27: #{tpu_custom_call.1} parent=19 // pred_region
          %s194 = sand.u32 %s16, 1
          %s195 = scalar_lea.sflag [#allocation6], %s194
          %s196 = sand.u32 %s92, 1
          %s197 = smul.addr %s196, 4
          %s198 = scalar_lea.vmem [#allocation7], %s197
          %s199 = smul.u32 4, %s23
          %s201 = ssub.s32 64, 64
          %202 = vsyncadd %s195, %s201
          %s203 = smul.addr %s199, 16
          %s204 = scalar_lea.hbm %s2, %s203
          %s206 = sshll.u32 %s198, 4
          %s207 = int_to_ptr.vmem [resolvable:$true] %s206
          %209 = dma.hbm_to_vmem [thread:$0]  %s204, 64, %s207, %s195
        $region28: #{tpu_custom_call.1} parent=19 // pred_fallthru
          _
      $region20: #{tpu_custom_call.1} parent=5 // pred_fallthru
        _
      %p210 = scmp.le.s32.totalorder 1, %s16
      %p211 = scmp.lt.s32.totalorder %s16, 3
      %p212 = pnand %p210, %p211
      %p213 = pneg %p212
      // Predicated region
      $region29: #{tpu_custom_call.1} parent=5 // pred_check
        _
      $region30: #{tpu_custom_call.1} parent=5 // pred_check_branch
        %215 = sbr.rel (%p212) target = $region32
      $region31: #{tpu_custom_call.1} parent=5 // pred_region
        %s216 = ssub.s32 %s16, 1
        // Predicated region
        $region33: #{tpu_custom_call.1} parent=31 // pred_check
          %p217 = pneg %p54
        $region34: #{tpu_custom_call.1} parent=31 // pred_check_branch
          %219 = sbr.rel (%p217) target = $region36
        $region35: #{tpu_custom_call.1} parent=31 // pred_region
          %220 = dma.done [#allocation3], 1024
        $region36: #{tpu_custom_call.1} parent=31 // pred_fallthru
          _
        %s221 = sand.u32 %s21, 1
        %s222 = scalar_lea.sflag [#allocation6], %s221
        %s223 = sand.u32 %s69, 1
        %s224 = smul.addr %s223, 8192
        %s225 = scalar_lea.vmem [#allocation5], %s224
        // Predicated region
        $region37: #{tpu_custom_call.1} parent=31 // pred_check
          %p226 = pneg %p82
        $region38: #{tpu_custom_call.1} parent=31 // pred_check_branch
          %228 = sbr.rel (%p226) target = $region40
        $region39: #{tpu_custom_call.1} parent=31 // pred_region
          %229 = dma.done %s222, 131072
        $region40: #{tpu_custom_call.1} parent=31 // pred_fallthru
          _
        %s230 = sand.u32 %s21, 1
        %s231 = scalar_lea.sflag [#allocation6], %s230
        %s232 = sand.u32 %s95, 1
        %s233 = smul.addr %s232, 4
        %s234 = scalar_lea.vmem [#allocation7], %s233
        // Predicated region
        $region41: #{tpu_custom_call.1} parent=31 // pred_check
          %p235 = pneg %p108
        $region42: #{tpu_custom_call.1} parent=31 // pred_check_branch
          %237 = sbr.rel (%p235) target = $region44
        $region43: #{tpu_custom_call.1} parent=31 // pred_region
          %238 = dma.done %s231, 64
        $region44: #{tpu_custom_call.1} parent=31 // pred_fallthru
          _
        %p239 = pneg %p54
        %p240 = pneg %p51
        %s241 = sand.u32 %s21, 1
        %s242 = scalar_lea.sflag [#allocation6], %s241
        %s243 = sand.u32 %s69, 1
        %s244 = smul.addr %s243, 8192
        %s245 = scalar_lea.vmem [#allocation5], %s244
        %p246 = pneg %p82
        %p247 = pneg %p79
        %s248 = sand.u32 %s21, 1
        %s249 = scalar_lea.sflag [#allocation6], %s248
        %s250 = sand.u32 %s95, 1
        %s251 = smul.addr %s250, 4
        %s252 = scalar_lea.vmem [#allocation7], %s251
        %p253 = pneg %p108
        %p254 = pneg %p105
        %p255 = pneg %p134
        %p256 = pneg %p131
        %s257 = sand.u32 %s121, 1
        %s258 = scalar_lea.sflag [#allocation4], %s257
        %s259 = sand.u32 %s121, 1
        %s260 = smul.addr %s259, 16
        %s261 = scalar_lea.vmem [#allocation8], %s260
        %s262 = smul.u32 16, %s26
        %s263 = smul.u32 256, %s26
        %s264 = smul.u32 4, %s25
        %s265 = smul.u32 4, %s25
        %s266 = smul.u32 4, %s25
        %p267 = scmp.eq.s32.totalorder %s26, 0
        // Predicated region
        $region45: #{tpu_custom_call.1} parent=31 // pred_check
          %p268 = pneg %p267
        $region46: #{tpu_custom_call.1} parent=31 // pred_check_branch
          %270 = sbr.rel (%p268) target = $region48
        $region47: #{tpu_custom_call.1} parent=31 // pred_region
          %v271 = vld [vmem:[%s234] sm:$0xf]
          %v273 = vlaneseq
          %v274 = vshrl.u32 %v273, 7
          %v275 = vsub.s32 0, %v274
          %v276 = vrot.slane %v271, %v275
          %v277 = vlaneseq
          %v278 = vshrl.u32 %v277, 7
          %v279 = vsub.s32 1, %v278
          %v280 = vrot.slane %v271, %v279
          %v281 = vlaneseq
          %v282 = vshrl.u32 %v281, 7
          %v283 = vsub.s32 2, %v282
          %v284 = vrot.slane %v271, %v283
          %v285 = vlaneseq
          %v286 = vshrl.u32 %v285, 7
          %v287 = vsub.s32 3, %v286
          %v288 = vrot.slane %v271, %v287
          %v289 = vcombine.low %v276, %v280
          %v290 = vcombine.low %v284, %v288
          %293 = vst [vmem:[%s261] sm:$0xff] %v289
          %294 = vst [vmem:[%s261 + $0x8] sm:$0xff] %v290
        $region48: #{tpu_custom_call.1} parent=31 // pred_fallthru
          _
        %v295 = vld [vmem:[%s261] sm:$0xff]
        %v296 = vld [vmem:[%s261 + $0x8] sm:$0xff]
        %v297 = vld [vmem:[#allocation2] sm:$0xff]
        %v298 = vld [vmem:[#allocation2 + $0x8] sm:$0xff]
        %v299 = vld [vmem:[#allocation2 + $0x10] sm:$0xff]
        %v300 = vld [vmem:[#allocation2 + $0x18] sm:$0xff]
        %v301 = vld [vmem:[#allocation2 + $0x20] sm:$0xff]
        %v302 = vld [vmem:[#allocation2 + $0x28] sm:$0xff]
        %v303 = vld [vmem:[#allocation2 + $0x30] sm:$0xff]
        %v304 = vld [vmem:[#allocation2 + $0x38] sm:$0xff]
        %v305 = vld [vmem:[%s225] sm:$0xff]
        %v306 = vld [vmem:[%s225 + $0x8] sm:$0xff]
        %v307 = vld [vmem:[%s225 + $0x10] sm:$0xff]
        %v308 = vld [vmem:[%s225 + $0x18] sm:$0xff]
        %v309 = vld [vmem:[%s225 + $0x20] sm:$0xff]
        %v310 = vld [vmem:[%s225 + $0x28] sm:$0xff]
        %v311 = vld [vmem:[%s225 + $0x30] sm:$0xff]
        %v312 = vld [vmem:[%s225 + $0x38] sm:$0xff]
        %v313 = vld [vmem:[%s225 + $0x40] sm:$0xff]
        %v314 = vld [vmem:[%s225 + $0x48] sm:$0xff]
        %v315 = vld [vmem:[%s225 + $0x50] sm:$0xff]
        %v316 = vld [vmem:[%s225 + $0x58] sm:$0xff]
        %v317 = vld [vmem:[%s225 + $0x60] sm:$0xff]
        %v318 = vld [vmem:[%s225 + $0x68] sm:$0xff]
        %v319 = vld [vmem:[%s225 + $0x70] sm:$0xff]
        %v320 = vld [vmem:[%s225 + $0x78] sm:$0xff]
        %v321 = vld [vmem:[%s225 + $0x80] sm:$0xff]
        %v322 = vld [vmem:[%s225 + $0x88] sm:$0xff]
        %v323 = vld [vmem:[%s225 + $0x90] sm:$0xff]
        %v324 = vld [vmem:[%s225 + $0x98] sm:$0xff]
        %v325 = vld [vmem:[%s225 + $0xa0] sm:$0xff]
        %v326 = vld [vmem:[%s225 + $0xa8] sm:$0xff]
        %v327 = vld [vmem:[%s225 + $0xb0] sm:$0xff]
        %v328 = vld [vmem:[%s225 + $0xb8] sm:$0xff]
        %v329 = vld [vmem:[%s225 + $0xc0] sm:$0xff]
        %v330 = vld [vmem:[%s225 + $0xc8] sm:$0xff]
        %v331 = vld [vmem:[%s225 + $0xd0] sm:$0xff]
        %v332 = vld [vmem:[%s225 + $0xd8] sm:$0xff]
        %v333 = vld [vmem:[%s225 + $0xe0] sm:$0xff]
        %v334 = vld [vmem:[%s225 + $0xe8] sm:$0xff]
        %v335 = vld [vmem:[%s225 + $0xf0] sm:$0xff]
        %v336 = vld [vmem:[%s225 + $0xf8] sm:$0xff]
        %v337 = vld [vmem:[%s225 + $0x100] sm:$0xff]
        %v338 = vld [vmem:[%s225 + $0x108] sm:$0xff]
        %v339 = vld [vmem:[%s225 + $0x110] sm:$0xff]
        %v340 = vld [vmem:[%s225 + $0x118] sm:$0xff]
        %v341 = vld [vmem:[%s225 + $0x120] sm:$0xff]
        %v342 = vld [vmem:[%s225 + $0x128] sm:$0xff]
        %v343 = vld [vmem:[%s225 + $0x130] sm:$0xff]
        %v344 = vld [vmem:[%s225 + $0x138] sm:$0xff]
        %v345 = vld [vmem:[%s225 + $0x140] sm:$0xff]
        %v346 = vld [vmem:[%s225 + $0x148] sm:$0xff]
        %v347 = vld [vmem:[%s225 + $0x150] sm:$0xff]
        %v348 = vld [vmem:[%s225 + $0x158] sm:$0xff]
        %v349 = vld [vmem:[%s225 + $0x160] sm:$0xff]
        %v350 = vld [vmem:[%s225 + $0x168] sm:$0xff]
        %v351 = vld [vmem:[%s225 + $0x170] sm:$0xff]
        %v352 = vld [vmem:[%s225 + $0x178] sm:$0xff]
        %v353 = vld [vmem:[%s225 + $0x180] sm:$0xff]
        %v354 = vld [vmem:[%s225 + $0x188] sm:$0xff]
        %v355 = vld [vmem:[%s225 + $0x190] sm:$0xff]
        %v356 = vld [vmem:[%s225 + $0x198] sm:$0xff]
        %v357 = vld [vmem:[%s225 + $0x1a0] sm:$0xff]
        %v358 = vld [vmem:[%s225 + $0x1a8] sm:$0xff]
        %v359 = vld [vmem:[%s225 + $0x1b0] sm:$0xff]
        %v360 = vld [vmem:[%s225 + $0x1b8] sm:$0xff]
        %v361 = vld [vmem:[%s225 + $0x1c0] sm:$0xff]
        %v362 = vld [vmem:[%s225 + $0x1c8] sm:$0xff]
        %v363 = vld [vmem:[%s225 + $0x1d0] sm:$0xff]
        %v364 = vld [vmem:[%s225 + $0x1d8] sm:$0xff]
        %v365 = vld [vmem:[%s225 + $0x1e0] sm:$0xff]
        %v366 = vld [vmem:[%s225 + $0x1e8] sm:$0xff]
        %v367 = vld [vmem:[%s225 + $0x1f0] sm:$0xff]
        %v368 = vld [vmem:[%s225 + $0x1f8] sm:$0xff]
        %v369 = vld [vmem:[%s225 + $0x200] sm:$0xff]
        %v370 = vld [vmem:[%s225 + $0x208] sm:$0xff]
        %v371 = vld [vmem:[%s225 + $0x210] sm:$0xff]
        %v372 = vld [vmem:[%s225 + $0x218] sm:$0xff]
        %v373 = vld [vmem:[%s225 + $0x220] sm:$0xff]
        %v374 = vld [vmem:[%s225 + $0x228] sm:$0xff]
        %v375 = vld [vmem:[%s225 + $0x230] sm:$0xff]
        %v376 = vld [vmem:[%s225 + $0x238] sm:$0xff]
        %v377 = vld [vmem:[%s225 + $0x240] sm:$0xff]
        %v378 = vld [vmem:[%s225 + $0x248] sm:$0xff]
        %v379 = vld [vmem:[%s225 + $0x250] sm:$0xff]
        %v380 = vld [vmem:[%s225 + $0x258] sm:$0xff]
        %v381 = vld [vmem:[%s225 + $0x260] sm:$0xff]
        %v382 = vld [vmem:[%s225 + $0x268] sm:$0xff]
        %v383 = vld [vmem:[%s225 + $0x270] sm:$0xff]
        %v384 = vld [vmem:[%s225 + $0x278] sm:$0xff]
        %v385 = vld [vmem:[%s225 + $0x280] sm:$0xff]
        %v386 = vld [vmem:[%s225 + $0x288] sm:$0xff]
        %v387 = vld [vmem:[%s225 + $0x290] sm:$0xff]
        %v388 = vld [vmem:[%s225 + $0x298] sm:$0xff]
        %v389 = vld [vmem:[%s225 + $0x2a0] sm:$0xff]
        %v390 = vld [vmem:[%s225 + $0x2a8] sm:$0xff]
        %v391 = vld [vmem:[%s225 + $0x2b0] sm:$0xff]
        %v392 = vld [vmem:[%s225 + $0x2b8] sm:$0xff]
        %v393 = vld [vmem:[%s225 + $0x2c0] sm:$0xff]
        %v394 = vld [vmem:[%s225 + $0x2c8] sm:$0xff]
        %v395 = vld [vmem:[%s225 + $0x2d0] sm:$0xff]
        %v396 = vld [vmem:[%s225 + $0x2d8] sm:$0xff]
        %v397 = vld [vmem:[%s225 + $0x2e0] sm:$0xff]
        %v398 = vld [vmem:[%s225 + $0x2e8] sm:$0xff]
        %v399 = vld [vmem:[%s225 + $0x2f0] sm:$0xff]
        %v400 = vld [vmem:[%s225 + $0x2f8] sm:$0xff]
        %v401 = vld [vmem:[%s225 + $0x300] sm:$0xff]
        %v402 = vld [vmem:[%s225 + $0x308] sm:$0xff]
        %v403 = vld [vmem:[%s225 + $0x310] sm:$0xff]
        %v404 = vld [vmem:[%s225 + $0x318] sm:$0xff]
        %v405 = vld [vmem:[%s225 + $0x320] sm:$0xff]
        %v406 = vld [vmem:[%s225 + $0x328] sm:$0xff]
        %v407 = vld [vmem:[%s225 + $0x330] sm:$0xff]
        %v408 = vld [vmem:[%s225 + $0x338] sm:$0xff]
        %v409 = vld [vmem:[%s225 + $0x340] sm:$0xff]
        %v410 = vld [vmem:[%s225 + $0x348] sm:$0xff]
        %v411 = vld [vmem:[%s225 + $0x350] sm:$0xff]
        %v412 = vld [vmem:[%s225 + $0x358] sm:$0xff]
        %v413 = vld [vmem:[%s225 + $0x360] sm:$0xff]
        %v414 = vld [vmem:[%s225 + $0x368] sm:$0xff]
        %v415 = vld [vmem:[%s225 + $0x370] sm:$0xff]
        %v416 = vld [vmem:[%s225 + $0x378] sm:$0xff]
        %v417 = vld [vmem:[%s225 + $0x380] sm:$0xff]
        %v418 = vld [vmem:[%s225 + $0x388] sm:$0xff]
        %v419 = vld [vmem:[%s225 + $0x390] sm:$0xff]
        %v420 = vld [vmem:[%s225 + $0x398] sm:$0xff]
        %v421 = vld [vmem:[%s225 + $0x3a0] sm:$0xff]
        %v422 = vld [vmem:[%s225 + $0x3a8] sm:$0xff]
        %v423 = vld [vmem:[%s225 + $0x3b0] sm:$0xff]
        %v424 = vld [vmem:[%s225 + $0x3b8] sm:$0xff]
        %v425 = vld [vmem:[%s225 + $0x3c0] sm:$0xff]
        %v426 = vld [vmem:[%s225 + $0x3c8] sm:$0xff]
        %v427 = vld [vmem:[%s225 + $0x3d0] sm:$0xff]
        %v428 = vld [vmem:[%s225 + $0x3d8] sm:$0xff]
        %v429 = vld [vmem:[%s225 + $0x3e0] sm:$0xff]
        %v430 = vld [vmem:[%s225 + $0x3e8] sm:$0xff]
        %v431 = vld [vmem:[%s225 + $0x3f0] sm:$0xff]
        %v432 = vld [vmem:[%s225 + $0x3f8] sm:$0xff]
        %v433 = vld [vmem:[%s225 + $0x400] sm:$0xff]
        %v434 = vld [vmem:[%s225 + $0x408] sm:$0xff]
        %v435 = vld [vmem:[%s225 + $0x410] sm:$0xff]
        %v436 = vld [vmem:[%s225 + $0x418] sm:$0xff]
        %v437 = vld [vmem:[%s225 + $0x420] sm:$0xff]
        %v438 = vld [vmem:[%s225 + $0x428] sm:$0xff]
        %v439 = vld [vmem:[%s225 + $0x430] sm:$0xff]
        %v440 = vld [vmem:[%s225 + $0x438] sm:$0xff]
        %v441 = vld [vmem:[%s225 + $0x440] sm:$0xff]
        %v442 = vld [vmem:[%s225 + $0x448] sm:$0xff]
        %v443 = vld [vmem:[%s225 + $0x450] sm:$0xff]
        %v444 = vld [vmem:[%s225 + $0x458] sm:$0xff]
        %v445 = vld [vmem:[%s225 + $0x460] sm:$0xff]
        %v446 = vld [vmem:[%s225 + $0x468] sm:$0xff]
        %v447 = vld [vmem:[%s225 + $0x470] sm:$0xff]
        %v448 = vld [vmem:[%s225 + $0x478] sm:$0xff]
        %v449 = vld [vmem:[%s225 + $0x480] sm:$0xff]
        %v450 = vld [vmem:[%s225 + $0x488] sm:$0xff]
        %v451 = vld [vmem:[%s225 + $0x490] sm:$0xff]
        %v452 = vld [vmem:[%s225 + $0x498] sm:$0xff]
        %v453 = vld [vmem:[%s225 + $0x4a0] sm:$0xff]
        %v454 = vld [vmem:[%s225 + $0x4a8] sm:$0xff]
        %v455 = vld [vmem:[%s225 + $0x4b0] sm:$0xff]
        %v456 = vld [vmem:[%s225 + $0x4b8] sm:$0xff]
        %v457 = vld [vmem:[%s225 + $0x4c0] sm:$0xff]
        %v458 = vld [vmem:[%s225 + $0x4c8] sm:$0xff]
        %v459 = vld [vmem:[%s225 + $0x4d0] sm:$0xff]
        %v460 = vld [vmem:[%s225 + $0x4d8] sm:$0xff]
        %v461 = vld [vmem:[%s225 + $0x4e0] sm:$0xff]
        %v462 = vld [vmem:[%s225 + $0x4e8] sm:$0xff]
        %v463 = vld [vmem:[%s225 + $0x4f0] sm:$0xff]
        %v464 = vld [vmem:[%s225 + $0x4f8] sm:$0xff]
        %v465 = vld [vmem:[%s225 + $0x500] sm:$0xff]
        %v466 = vld [vmem:[%s225 + $0x508] sm:$0xff]
        %v467 = vld [vmem:[%s225 + $0x510] sm:$0xff]
        %v468 = vld [vmem:[%s225 + $0x518] sm:$0xff]
        %v469 = vld [vmem:[%s225 + $0x520] sm:$0xff]
        %v470 = vld [vmem:[%s225 + $0x528] sm:$0xff]
        %v471 = vld [vmem:[%s225 + $0x530] sm:$0xff]
        %v472 = vld [vmem:[%s225 + $0x538] sm:$0xff]
        %v473 = vld [vmem:[%s225 + $0x540] sm:$0xff]
        %v474 = vld [vmem:[%s225 + $0x548] sm:$0xff]
        %v475 = vld [vmem:[%s225 + $0x550] sm:$0xff]
        %v476 = vld [vmem:[%s225 + $0x558] sm:$0xff]
        %v477 = vld [vmem:[%s225 + $0x560] sm:$0xff]
        %v478 = vld [vmem:[%s225 + $0x568] sm:$0xff]
        %v479 = vld [vmem:[%s225 + $0x570] sm:$0xff]
        %v480 = vld [vmem:[%s225 + $0x578] sm:$0xff]
        %v481 = vld [vmem:[%s225 + $0x580] sm:$0xff]
        %v482 = vld [vmem:[%s225 + $0x588] sm:$0xff]
        %v483 = vld [vmem:[%s225 + $0x590] sm:$0xff]
        %v484 = vld [vmem:[%s225 + $0x598] sm:$0xff]
        %v485 = vld [vmem:[%s225 + $0x5a0] sm:$0xff]
        %v486 = vld [vmem:[%s225 + $0x5a8] sm:$0xff]
        %v487 = vld [vmem:[%s225 + $0x5b0] sm:$0xff]
        %v488 = vld [vmem:[%s225 + $0x5b8] sm:$0xff]
        %v489 = vld [vmem:[%s225 + $0x5c0] sm:$0xff]
        %v490 = vld [vmem:[%s225 + $0x5c8] sm:$0xff]
        %v491 = vld [vmem:[%s225 + $0x5d0] sm:$0xff]
        %v492 = vld [vmem:[%s225 + $0x5d8] sm:$0xff]
        %v493 = vld [vmem:[%s225 + $0x5e0] sm:$0xff]
        %v494 = vld [vmem:[%s225 + $0x5e8] sm:$0xff]
        %v495 = vld [vmem:[%s225 + $0x5f0] sm:$0xff]
        %v496 = vld [vmem:[%s225 + $0x5f8] sm:$0xff]
        %v497 = vld [vmem:[%s225 + $0x600] sm:$0xff]
        %v498 = vld [vmem:[%s225 + $0x608] sm:$0xff]
        %v499 = vld [vmem:[%s225 + $0x610] sm:$0xff]
        %v500 = vld [vmem:[%s225 + $0x618] sm:$0xff]
        %v501 = vld [vmem:[%s225 + $0x620] sm:$0xff]
        %v502 = vld [vmem:[%s225 + $0x628] sm:$0xff]
        %v503 = vld [vmem:[%s225 + $0x630] sm:$0xff]
        %v504 = vld [vmem:[%s225 + $0x638] sm:$0xff]
        %v505 = vld [vmem:[%s225 + $0x640] sm:$0xff]
        %v506 = vld [vmem:[%s225 + $0x648] sm:$0xff]
        %v507 = vld [vmem:[%s225 + $0x650] sm:$0xff]
        %v508 = vld [vmem:[%s225 + $0x658] sm:$0xff]
        %v509 = vld [vmem:[%s225 + $0x660] sm:$0xff]
        %v510 = vld [vmem:[%s225 + $0x668] sm:$0xff]
        %v511 = vld [vmem:[%s225 + $0x670] sm:$0xff]
        %v512 = vld [vmem:[%s225 + $0x678] sm:$0xff]
        %v513 = vld [vmem:[%s225 + $0x680] sm:$0xff]
        %v514 = vld [vmem:[%s225 + $0x688] sm:$0xff]
        %v515 = vld [vmem:[%s225 + $0x690] sm:$0xff]
        %v516 = vld [vmem:[%s225 + $0x698] sm:$0xff]
        %v517 = vld [vmem:[%s225 + $0x6a0] sm:$0xff]
        %v518 = vld [vmem:[%s225 + $0x6a8] sm:$0xff]
        %v519 = vld [vmem:[%s225 + $0x6b0] sm:$0xff]
        %v520 = vld [vmem:[%s225 + $0x6b8] sm:$0xff]
        %v521 = vld [vmem:[%s225 + $0x6c0] sm:$0xff]
        %v522 = vld [vmem:[%s225 + $0x6c8] sm:$0xff]
        %v523 = vld [vmem:[%s225 + $0x6d0] sm:$0xff]
        %v524 = vld [vmem:[%s225 + $0x6d8] sm:$0xff]
        %v525 = vld [vmem:[%s225 + $0x6e0] sm:$0xff]
        %v526 = vld [vmem:[%s225 + $0x6e8] sm:$0xff]
        %v527 = vld [vmem:[%s225 + $0x6f0] sm:$0xff]
        %v528 = vld [vmem:[%s225 + $0x6f8] sm:$0xff]
        %v529 = vld [vmem:[%s225 + $0x700] sm:$0xff]
        %v530 = vld [vmem:[%s225 + $0x708] sm:$0xff]
        %v531 = vld [vmem:[%s225 + $0x710] sm:$0xff]
        %v532 = vld [vmem:[%s225 + $0x718] sm:$0xff]
        %v533 = vld [vmem:[%s225 + $0x720] sm:$0xff]
        %v534 = vld [vmem:[%s225 + $0x728] sm:$0xff]
        %v535 = vld [vmem:[%s225 + $0x730] sm:$0xff]
        %v536 = vld [vmem:[%s225 + $0x738] sm:$0xff]
        %v537 = vld [vmem:[%s225 + $0x740] sm:$0xff]
        %v538 = vld [vmem:[%s225 + $0x748] sm:$0xff]
        %v539 = vld [vmem:[%s225 + $0x750] sm:$0xff]
        %v540 = vld [vmem:[%s225 + $0x758] sm:$0xff]
        %v541 = vld [vmem:[%s225 + $0x760] sm:$0xff]
        %v542 = vld [vmem:[%s225 + $0x768] sm:$0xff]
        %v543 = vld [vmem:[%s225 + $0x770] sm:$0xff]
        %v544 = vld [vmem:[%s225 + $0x778] sm:$0xff]
        %v545 = vld [vmem:[%s225 + $0x780] sm:$0xff]
        %v546 = vld [vmem:[%s225 + $0x788] sm:$0xff]
        %v547 = vld [vmem:[%s225 + $0x790] sm:$0xff]
        %v548 = vld [vmem:[%s225 + $0x798] sm:$0xff]
        %v549 = vld [vmem:[%s225 + $0x7a0] sm:$0xff]
        %v550 = vld [vmem:[%s225 + $0x7a8] sm:$0xff]
        %v551 = vld [vmem:[%s225 + $0x7b0] sm:$0xff]
        %v552 = vld [vmem:[%s225 + $0x7b8] sm:$0xff]
        %v553 = vld [vmem:[%s225 + $0x7c0] sm:$0xff]
        %v554 = vld [vmem:[%s225 + $0x7c8] sm:$0xff]
        %v555 = vld [vmem:[%s225 + $0x7d0] sm:$0xff]
        %v556 = vld [vmem:[%s225 + $0x7d8] sm:$0xff]
        %v557 = vld [vmem:[%s225 + $0x7e0] sm:$0xff]
        %v558 = vld [vmem:[%s225 + $0x7e8] sm:$0xff]
        %v559 = vld [vmem:[%s225 + $0x7f0] sm:$0xff]
        %v560 = vld [vmem:[%s225 + $0x7f8] sm:$0xff]
        %v561 = vld [vmem:[%s225 + $0x800] sm:$0xff]
        %v562 = vld [vmem:[%s225 + $0x808] sm:$0xff]
        %v563 = vld [vmem:[%s225 + $0x810] sm:$0xff]
        %v564 = vld [vmem:[%s225 + $0x818] sm:$0xff]
        %v565 = vld [vmem:[%s225 + $0x820] sm:$0xff]
        %v566 = vld [vmem:[%s225 + $0x828] sm:$0xff]
        %v567 = vld [vmem:[%s225 + $0x830] sm:$0xff]
        %v568 = vld [vmem:[%s225 + $0x838] sm:$0xff]
        %v569 = vld [vmem:[%s225 + $0x840] sm:$0xff]
        %v570 = vld [vmem:[%s225 + $0x848] sm:$0xff]
        %v571 = vld [vmem:[%s225 + $0x850] sm:$0xff]
        %v572 = vld [vmem:[%s225 + $0x858] sm:$0xff]
        %v573 = vld [vmem:[%s225 + $0x860] sm:$0xff]
        %v574 = vld [vmem:[%s225 + $0x868] sm:$0xff]
        %v575 = vld [vmem:[%s225 + $0x870] sm:$0xff]
        %v576 = vld [vmem:[%s225 + $0x878] sm:$0xff]
        %v577 = vld [vmem:[%s225 + $0x880] sm:$0xff]
        %v578 = vld [vmem:[%s225 + $0x888] sm:$0xff]
        %v579 = vld [vmem:[%s225 + $0x890] sm:$0xff]
        %v580 = vld [vmem:[%s225 + $0x898] sm:$0xff]
        %v581 = vld [vmem:[%s225 + $0x8a0] sm:$0xff]
        %v582 = vld [vmem:[%s225 + $0x8a8] sm:$0xff]
        %v583 = vld [vmem:[%s225 + $0x8b0] sm:$0xff]
        %v584 = vld [vmem:[%s225 + $0x8b8] sm:$0xff]
        %v585 = vld [vmem:[%s225 + $0x8c0] sm:$0xff]
        %v586 = vld [vmem:[%s225 + $0x8c8] sm:$0xff]
        %v587 = vld [vmem:[%s225 + $0x8d0] sm:$0xff]
        %v588 = vld [vmem:[%s225 + $0x8d8] sm:$0xff]
        %v589 = vld [vmem:[%s225 + $0x8e0] sm:$0xff]
        %v590 = vld [vmem:[%s225 + $0x8e8] sm:$0xff]
        %v591 = vld [vmem:[%s225 + $0x8f0] sm:$0xff]
        %v592 = vld [vmem:[%s225 + $0x8f8] sm:$0xff]
        %v593 = vld [vmem:[%s225 + $0x900] sm:$0xff]
        %v594 = vld [vmem:[%s225 + $0x908] sm:$0xff]
        %v595 = vld [vmem:[%s225 + $0x910] sm:$0xff]
        %v596 = vld [vmem:[%s225 + $0x918] sm:$0xff]
        %v597 = vld [vmem:[%s225 + $0x920] sm:$0xff]
        %v598 = vld [vmem:[%s225 + $0x928] sm:$0xff]
        %v599 = vld [vmem:[%s225 + $0x930] sm:$0xff]
        %v600 = vld [vmem:[%s225 + $0x938] sm:$0xff]
        %v601 = vld [vmem:[%s225 + $0x940] sm:$0xff]
        %v602 = vld [vmem:[%s225 + $0x948] sm:$0xff]
        %v603 = vld [vmem:[%s225 + $0x950] sm:$0xff]
        %v604 = vld [vmem:[%s225 + $0x958] sm:$0xff]
        %v605 = vld [vmem:[%s225 + $0x960] sm:$0xff]
        %v606 = vld [vmem:[%s225 + $0x968] sm:$0xff]
        %v607 = vld [vmem:[%s225 + $0x970] sm:$0xff]
        %v608 = vld [vmem:[%s225 + $0x978] sm:$0xff]
        %v609 = vld [vmem:[%s225 + $0x980] sm:$0xff]
        %v610 = vld [vmem:[%s225 + $0x988] sm:$0xff]
        %v611 = vld [vmem:[%s225 + $0x990] sm:$0xff]
        %v612 = vld [vmem:[%s225 + $0x998] sm:$0xff]
        %v613 = vld [vmem:[%s225 + $0x9a0] sm:$0xff]
        %v614 = vld [vmem:[%s225 + $0x9a8] sm:$0xff]
        %v615 = vld [vmem:[%s225 + $0x9b0] sm:$0xff]
        %v616 = vld [vmem:[%s225 + $0x9b8] sm:$0xff]
        %v617 = vld [vmem:[%s225 + $0x9c0] sm:$0xff]
        %v618 = vld [vmem:[%s225 + $0x9c8] sm:$0xff]
        %v619 = vld [vmem:[%s225 + $0x9d0] sm:$0xff]
        %v620 = vld [vmem:[%s225 + $0x9d8] sm:$0xff]
        %v621 = vld [vmem:[%s225 + $0x9e0] sm:$0xff]
        %v622 = vld [vmem:[%s225 + $0x9e8] sm:$0xff]
        %v623 = vld [vmem:[%s225 + $0x9f0] sm:$0xff]
        %v624 = vld [vmem:[%s225 + $0x9f8] sm:$0xff]
        %v625 = vld [vmem:[%s225 + $0xa00] sm:$0xff]
        %v626 = vld [vmem:[%s225 + $0xa08] sm:$0xff]
        %v627 = vld [vmem:[%s225 + $0xa10] sm:$0xff]
        %v628 = vld [vmem:[%s225 + $0xa18] sm:$0xff]
        %v629 = vld [vmem:[%s225 + $0xa20] sm:$0xff]
        %v630 = vld [vmem:[%s225 + $0xa28] sm:$0xff]
        %v631 = vld [vmem:[%s225 + $0xa30] sm:$0xff]
        %v632 = vld [vmem:[%s225 + $0xa38] sm:$0xff]
        %v633 = vld [vmem:[%s225 + $0xa40] sm:$0xff]
        %v634 = vld [vmem:[%s225 + $0xa48] sm:$0xff]
        %v635 = vld [vmem:[%s225 + $0xa50] sm:$0xff]
        %v636 = vld [vmem:[%s225 + $0xa58] sm:$0xff]
        %v637 = vld [vmem:[%s225 + $0xa60] sm:$0xff]
        %v638 = vld [vmem:[%s225 + $0xa68] sm:$0xff]
        %v639 = vld [vmem:[%s225 + $0xa70] sm:$0xff]
        %v640 = vld [vmem:[%s225 + $0xa78] sm:$0xff]
        %v641 = vld [vmem:[%s225 + $0xa80] sm:$0xff]
        %v642 = vld [vmem:[%s225 + $0xa88] sm:$0xff]
        %v643 = vld [vmem:[%s225 + $0xa90] sm:$0xff]
        %v644 = vld [vmem:[%s225 + $0xa98] sm:$0xff]
        %v645 = vld [vmem:[%s225 + $0xaa0] sm:$0xff]
        %v646 = vld [vmem:[%s225 + $0xaa8] sm:$0xff]
        %v647 = vld [vmem:[%s225 + $0xab0] sm:$0xff]
        %v648 = vld [vmem:[%s225 + $0xab8] sm:$0xff]
        %v649 = vld [vmem:[%s225 + $0xac0] sm:$0xff]
        %v650 = vld [vmem:[%s225 + $0xac8] sm:$0xff]
        %v651 = vld [vmem:[%s225 + $0xad0] sm:$0xff]
        %v652 = vld [vmem:[%s225 + $0xad8] sm:$0xff]
        %v653 = vld [vmem:[%s225 + $0xae0] sm:$0xff]
        %v654 = vld [vmem:[%s225 + $0xae8] sm:$0xff]
        %v655 = vld [vmem:[%s225 + $0xaf0] sm:$0xff]
        %v656 = vld [vmem:[%s225 + $0xaf8] sm:$0xff]
        %v657 = vld [vmem:[%s225 + $0xb00] sm:$0xff]
        %v658 = vld [vmem:[%s225 + $0xb08] sm:$0xff]
        %v659 = vld [vmem:[%s225 + $0xb10] sm:$0xff]
        %v660 = vld [vmem:[%s225 + $0xb18] sm:$0xff]
        %v661 = vld [vmem:[%s225 + $0xb20] sm:$0xff]
        %v662 = vld [vmem:[%s225 + $0xb28] sm:$0xff]
        %v663 = vld [vmem:[%s225 + $0xb30] sm:$0xff]
        %v664 = vld [vmem:[%s225 + $0xb38] sm:$0xff]
        %v665 = vld [vmem:[%s225 + $0xb40] sm:$0xff]
        %v666 = vld [vmem:[%s225 + $0xb48] sm:$0xff]
        %v667 = vld [vmem:[%s225 + $0xb50] sm:$0xff]
        %v668 = vld [vmem:[%s225 + $0xb58] sm:$0xff]
        %v669 = vld [vmem:[%s225 + $0xb60] sm:$0xff]
        %v670 = vld [vmem:[%s225 + $0xb68] sm:$0xff]
        %v671 = vld [vmem:[%s225 + $0xb70] sm:$0xff]
        %v672 = vld [vmem:[%s225 + $0xb78] sm:$0xff]
        %v673 = vld [vmem:[%s225 + $0xb80] sm:$0xff]
        %v674 = vld [vmem:[%s225 + $0xb88] sm:$0xff]
        %v675 = vld [vmem:[%s225 + $0xb90] sm:$0xff]
        %v676 = vld [vmem:[%s225 + $0xb98] sm:$0xff]
        %v677 = vld [vmem:[%s225 + $0xba0] sm:$0xff]
        %v678 = vld [vmem:[%s225 + $0xba8] sm:$0xff]
        %v679 = vld [vmem:[%s225 + $0xbb0] sm:$0xff]
        %v680 = vld [vmem:[%s225 + $0xbb8] sm:$0xff]
        %v681 = vld [vmem:[%s225 + $0xbc0] sm:$0xff]
        %v682 = vld [vmem:[%s225 + $0xbc8] sm:$0xff]
        %v683 = vld [vmem:[%s225 + $0xbd0] sm:$0xff]
        %v684 = vld [vmem:[%s225 + $0xbd8] sm:$0xff]
        %v685 = vld [vmem:[%s225 + $0xbe0] sm:$0xff]
        %v686 = vld [vmem:[%s225 + $0xbe8] sm:$0xff]
        %v687 = vld [vmem:[%s225 + $0xbf0] sm:$0xff]
        %v688 = vld [vmem:[%s225 + $0xbf8] sm:$0xff]
        %v689 = vld [vmem:[%s225 + $0xc00] sm:$0xff]
        %v690 = vld [vmem:[%s225 + $0xc08] sm:$0xff]
        %v691 = vld [vmem:[%s225 + $0xc10] sm:$0xff]
        %v692 = vld [vmem:[%s225 + $0xc18] sm:$0xff]
        %v693 = vld [vmem:[%s225 + $0xc20] sm:$0xff]
        %v694 = vld [vmem:[%s225 + $0xc28] sm:$0xff]
        %v695 = vld [vmem:[%s225 + $0xc30] sm:$0xff]
        %v696 = vld [vmem:[%s225 + $0xc38] sm:$0xff]
        %v697 = vld [vmem:[%s225 + $0xc40] sm:$0xff]
        %v698 = vld [vmem:[%s225 + $0xc48] sm:$0xff]
        %v699 = vld [vmem:[%s225 + $0xc50] sm:$0xff]
        %v700 = vld [vmem:[%s225 + $0xc58] sm:$0xff]
        %v701 = vld [vmem:[%s225 + $0xc60] sm:$0xff]
        %v702 = vld [vmem:[%s225 + $0xc68] sm:$0xff]
        %v703 = vld [vmem:[%s225 + $0xc70] sm:$0xff]
        %v704 = vld [vmem:[%s225 + $0xc78] sm:$0xff]
        %v705 = vld [vmem:[%s225 + $0xc80] sm:$0xff]
        %v706 = vld [vmem:[%s225 + $0xc88] sm:$0xff]
        %v707 = vld [vmem:[%s225 + $0xc90] sm:$0xff]
        %v708 = vld [vmem:[%s225 + $0xc98] sm:$0xff]
        %v709 = vld [vmem:[%s225 + $0xca0] sm:$0xff]
        %v710 = vld [vmem:[%s225 + $0xca8] sm:$0xff]
        %v711 = vld [vmem:[%s225 + $0xcb0] sm:$0xff]
        %v712 = vld [vmem:[%s225 + $0xcb8] sm:$0xff]
        %v713 = vld [vmem:[%s225 + $0xcc0] sm:$0xff]
        %v714 = vld [vmem:[%s225 + $0xcc8] sm:$0xff]
        %v715 = vld [vmem:[%s225 + $0xcd0] sm:$0xff]
        %v716 = vld [vmem:[%s225 + $0xcd8] sm:$0xff]
        %v717 = vld [vmem:[%s225 + $0xce0] sm:$0xff]
        %v718 = vld [vmem:[%s225 + $0xce8] sm:$0xff]
        %v719 = vld [vmem:[%s225 + $0xcf0] sm:$0xff]
        %v720 = vld [vmem:[%s225 + $0xcf8] sm:$0xff]
        %v721 = vld [vmem:[%s225 + $0xd00] sm:$0xff]
        %v722 = vld [vmem:[%s225 + $0xd08] sm:$0xff]
        %v723 = vld [vmem:[%s225 + $0xd10] sm:$0xff]
        %v724 = vld [vmem:[%s225 + $0xd18] sm:$0xff]
        %v725 = vld [vmem:[%s225 + $0xd20] sm:$0xff]
        %v726 = vld [vmem:[%s225 + $0xd28] sm:$0xff]
        %v727 = vld [vmem:[%s225 + $0xd30] sm:$0xff]
        %v728 = vld [vmem:[%s225 + $0xd38] sm:$0xff]
        %v729 = vld [vmem:[%s225 + $0xd40] sm:$0xff]
        %v730 = vld [vmem:[%s225 + $0xd48] sm:$0xff]
        %v731 = vld [vmem:[%s225 + $0xd50] sm:$0xff]
        %v732 = vld [vmem:[%s225 + $0xd58] sm:$0xff]
        %v733 = vld [vmem:[%s225 + $0xd60] sm:$0xff]
        %v734 = vld [vmem:[%s225 + $0xd68] sm:$0xff]
        %v735 = vld [vmem:[%s225 + $0xd70] sm:$0xff]
        %v736 = vld [vmem:[%s225 + $0xd78] sm:$0xff]
        %v737 = vld [vmem:[%s225 + $0xd80] sm:$0xff]
        %v738 = vld [vmem:[%s225 + $0xd88] sm:$0xff]
        %v739 = vld [vmem:[%s225 + $0xd90] sm:$0xff]
        %v740 = vld [vmem:[%s225 + $0xd98] sm:$0xff]
        %v741 = vld [vmem:[%s225 + $0xda0] sm:$0xff]
        %v742 = vld [vmem:[%s225 + $0xda8] sm:$0xff]
        %v743 = vld [vmem:[%s225 + $0xdb0] sm:$0xff]
        %v744 = vld [vmem:[%s225 + $0xdb8] sm:$0xff]
        %v745 = vld [vmem:[%s225 + $0xdc0] sm:$0xff]
        %v746 = vld [vmem:[%s225 + $0xdc8] sm:$0xff]
        %v747 = vld [vmem:[%s225 + $0xdd0] sm:$0xff]
        %v748 = vld [vmem:[%s225 + $0xdd8] sm:$0xff]
        %v749 = vld [vmem:[%s225 + $0xde0] sm:$0xff]
        %v750 = vld [vmem:[%s225 + $0xde8] sm:$0xff]
        %v751 = vld [vmem:[%s225 + $0xdf0] sm:$0xff]
        %v752 = vld [vmem:[%s225 + $0xdf8] sm:$0xff]
        %v753 = vld [vmem:[%s225 + $0xe00] sm:$0xff]
        %v754 = vld [vmem:[%s225 + $0xe08] sm:$0xff]
        %v755 = vld [vmem:[%s225 + $0xe10] sm:$0xff]
        %v756 = vld [vmem:[%s225 + $0xe18] sm:$0xff]
        %v757 = vld [vmem:[%s225 + $0xe20] sm:$0xff]
        %v758 = vld [vmem:[%s225 + $0xe28] sm:$0xff]
        %v759 = vld [vmem:[%s225 + $0xe30] sm:$0xff]
        %v760 = vld [vmem:[%s225 + $0xe38] sm:$0xff]
        %v761 = vld [vmem:[%s225 + $0xe40] sm:$0xff]
        %v762 = vld [vmem:[%s225 + $0xe48] sm:$0xff]
        %v763 = vld [vmem:[%s225 + $0xe50] sm:$0xff]
        %v764 = vld [vmem:[%s225 + $0xe58] sm:$0xff]
        %v765 = vld [vmem:[%s225 + $0xe60] sm:$0xff]
        %v766 = vld [vmem:[%s225 + $0xe68] sm:$0xff]
        %v767 = vld [vmem:[%s225 + $0xe70] sm:$0xff]
        %v768 = vld [vmem:[%s225 + $0xe78] sm:$0xff]
        %v769 = vld [vmem:[%s225 + $0xe80] sm:$0xff]
        %v770 = vld [vmem:[%s225 + $0xe88] sm:$0xff]
        %v771 = vld [vmem:[%s225 + $0xe90] sm:$0xff]
        %v772 = vld [vmem:[%s225 + $0xe98] sm:$0xff]
        %v773 = vld [vmem:[%s225 + $0xea0] sm:$0xff]
        %v774 = vld [vmem:[%s225 + $0xea8] sm:$0xff]
        %v775 = vld [vmem:[%s225 + $0xeb0] sm:$0xff]
        %v776 = vld [vmem:[%s225 + $0xeb8] sm:$0xff]
        %v777 = vld [vmem:[%s225 + $0xec0] sm:$0xff]
        %v778 = vld [vmem:[%s225 + $0xec8] sm:$0xff]
        %v779 = vld [vmem:[%s225 + $0xed0] sm:$0xff]
        %v780 = vld [vmem:[%s225 + $0xed8] sm:$0xff]
        %v781 = vld [vmem:[%s225 + $0xee0] sm:$0xff]
        %v782 = vld [vmem:[%s225 + $0xee8] sm:$0xff]
        %v783 = vld [vmem:[%s225 + $0xef0] sm:$0xff]
        %v784 = vld [vmem:[%s225 + $0xef8] sm:$0xff]
        %v785 = vld [vmem:[%s225 + $0xf00] sm:$0xff]
        %v786 = vld [vmem:[%s225 + $0xf08] sm:$0xff]
        %v787 = vld [vmem:[%s225 + $0xf10] sm:$0xff]
        %v788 = vld [vmem:[%s225 + $0xf18] sm:$0xff]
        %v789 = vld [vmem:[%s225 + $0xf20] sm:$0xff]
        %v790 = vld [vmem:[%s225 + $0xf28] sm:$0xff]
        %v791 = vld [vmem:[%s225 + $0xf30] sm:$0xff]
        %v792 = vld [vmem:[%s225 + $0xf38] sm:$0xff]
        %v793 = vld [vmem:[%s225 + $0xf40] sm:$0xff]
        %v794 = vld [vmem:[%s225 + $0xf48] sm:$0xff]
        %v795 = vld [vmem:[%s225 + $0xf50] sm:$0xff]
        %v796 = vld [vmem:[%s225 + $0xf58] sm:$0xff]
        %v797 = vld [vmem:[%s225 + $0xf60] sm:$0xff]
        %v798 = vld [vmem:[%s225 + $0xf68] sm:$0xff]
        %v799 = vld [vmem:[%s225 + $0xf70] sm:$0xff]
        %v800 = vld [vmem:[%s225 + $0xf78] sm:$0xff]
        %v801 = vld [vmem:[%s225 + $0xf80] sm:$0xff]
        %v802 = vld [vmem:[%s225 + $0xf88] sm:$0xff]
        %v803 = vld [vmem:[%s225 + $0xf90] sm:$0xff]
        %v804 = vld [vmem:[%s225 + $0xf98] sm:$0xff]
        %v805 = vld [vmem:[%s225 + $0xfa0] sm:$0xff]
        %v806 = vld [vmem:[%s225 + $0xfa8] sm:$0xff]
        %v807 = vld [vmem:[%s225 + $0xfb0] sm:$0xff]
        %v808 = vld [vmem:[%s225 + $0xfb8] sm:$0xff]
        %v809 = vld [vmem:[%s225 + $0xfc0] sm:$0xff]
        %v810 = vld [vmem:[%s225 + $0xfc8] sm:$0xff]
        %v811 = vld [vmem:[%s225 + $0xfd0] sm:$0xff]
        %v812 = vld [vmem:[%s225 + $0xfd8] sm:$0xff]
        %v813 = vld [vmem:[%s225 + $0xfe0] sm:$0xff]
        %v814 = vld [vmem:[%s225 + $0xfe8] sm:$0xff]
        %v815 = vld [vmem:[%s225 + $0xff0] sm:$0xff]
        %v816 = vld [vmem:[%s225 + $0xff8] sm:$0xff]
        %v817 = vld [vmem:[%s225 + $0x1000] sm:$0xff]
        %v818 = vld [vmem:[%s225 + $0x1008] sm:$0xff]
        %v819 = vld [vmem:[%s225 + $0x1010] sm:$0xff]
        %v820 = vld [vmem:[%s225 + $0x1018] sm:$0xff]
        %v821 = vld [vmem:[%s225 + $0x1020] sm:$0xff]
        %v822 = vld [vmem:[%s225 + $0x1028] sm:$0xff]
        %v823 = vld [vmem:[%s225 + $0x1030] sm:$0xff]
        %v824 = vld [vmem:[%s225 + $0x1038] sm:$0xff]
        %v825 = vld [vmem:[%s225 + $0x1040] sm:$0xff]
        %v826 = vld [vmem:[%s225 + $0x1048] sm:$0xff]
        %v827 = vld [vmem:[%s225 + $0x1050] sm:$0xff]
        %v828 = vld [vmem:[%s225 + $0x1058] sm:$0xff]
        %v829 = vld [vmem:[%s225 + $0x1060] sm:$0xff]
        %v830 = vld [vmem:[%s225 + $0x1068] sm:$0xff]
        %v831 = vld [vmem:[%s225 + $0x1070] sm:$0xff]
        %v832 = vld [vmem:[%s225 + $0x1078] sm:$0xff]
        %v833 = vld [vmem:[%s225 + $0x1080] sm:$0xff]
        %v834 = vld [vmem:[%s225 + $0x1088] sm:$0xff]
        %v835 = vld [vmem:[%s225 + $0x1090] sm:$0xff]
        %v836 = vld [vmem:[%s225 + $0x1098] sm:$0xff]
        %v837 = vld [vmem:[%s225 + $0x10a0] sm:$0xff]
        %v838 = vld [vmem:[%s225 + $0x10a8] sm:$0xff]
        %v839 = vld [vmem:[%s225 + $0x10b0] sm:$0xff]
        %v840 = vld [vmem:[%s225 + $0x10b8] sm:$0xff]
        %v841 = vld [vmem:[%s225 + $0x10c0] sm:$0xff]
        %v842 = vld [vmem:[%s225 + $0x10c8] sm:$0xff]
        %v843 = vld [vmem:[%s225 + $0x10d0] sm:$0xff]
        %v844 = vld [vmem:[%s225 + $0x10d8] sm:$0xff]
        %v845 = vld [vmem:[%s225 + $0x10e0] sm:$0xff]
        %v846 = vld [vmem:[%s225 + $0x10e8] sm:$0xff]
        %v847 = vld [vmem:[%s225 + $0x10f0] sm:$0xff]
        %v848 = vld [vmem:[%s225 + $0x10f8] sm:$0xff]
        %v849 = vld [vmem:[%s225 + $0x1100] sm:$0xff]
        %v850 = vld [vmem:[%s225 + $0x1108] sm:$0xff]
        %v851 = vld [vmem:[%s225 + $0x1110] sm:$0xff]
        %v852 = vld [vmem:[%s225 + $0x1118] sm:$0xff]
        %v853 = vld [vmem:[%s225 + $0x1120] sm:$0xff]
        %v854 = vld [vmem:[%s225 + $0x1128] sm:$0xff]
        %v855 = vld [vmem:[%s225 + $0x1130] sm:$0xff]
        %v856 = vld [vmem:[%s225 + $0x1138] sm:$0xff]
        %v857 = vld [vmem:[%s225 + $0x1140] sm:$0xff]
        %v858 = vld [vmem:[%s225 + $0x1148] sm:$0xff]
        %v859 = vld [vmem:[%s225 + $0x1150] sm:$0xff]
        %v860 = vld [vmem:[%s225 + $0x1158] sm:$0xff]
        %v861 = vld [vmem:[%s225 + $0x1160] sm:$0xff]
        %v862 = vld [vmem:[%s225 + $0x1168] sm:$0xff]
        %v863 = vld [vmem:[%s225 + $0x1170] sm:$0xff]
        %v864 = vld [vmem:[%s225 + $0x1178] sm:$0xff]
        %v865 = vld [vmem:[%s225 + $0x1180] sm:$0xff]
        %v866 = vld [vmem:[%s225 + $0x1188] sm:$0xff]
        %v867 = vld [vmem:[%s225 + $0x1190] sm:$0xff]
        %v868 = vld [vmem:[%s225 + $0x1198] sm:$0xff]
        %v869 = vld [vmem:[%s225 + $0x11a0] sm:$0xff]
        %v870 = vld [vmem:[%s225 + $0x11a8] sm:$0xff]
        %v871 = vld [vmem:[%s225 + $0x11b0] sm:$0xff]
        %v872 = vld [vmem:[%s225 + $0x11b8] sm:$0xff]
        %v873 = vld [vmem:[%s225 + $0x11c0] sm:$0xff]
        %v874 = vld [vmem:[%s225 + $0x11c8] sm:$0xff]
        %v875 = vld [vmem:[%s225 + $0x11d0] sm:$0xff]
        %v876 = vld [vmem:[%s225 + $0x11d8] sm:$0xff]
        %v877 = vld [vmem:[%s225 + $0x11e0] sm:$0xff]
        %v878 = vld [vmem:[%s225 + $0x11e8] sm:$0xff]
        %v879 = vld [vmem:[%s225 + $0x11f0] sm:$0xff]
        %v880 = vld [vmem:[%s225 + $0x11f8] sm:$0xff]
        %v881 = vld [vmem:[%s225 + $0x1200] sm:$0xff]
        %v882 = vld [vmem:[%s225 + $0x1208] sm:$0xff]
        %v883 = vld [vmem:[%s225 + $0x1210] sm:$0xff]
        %v884 = vld [vmem:[%s225 + $0x1218] sm:$0xff]
        %v885 = vld [vmem:[%s225 + $0x1220] sm:$0xff]
        %v886 = vld [vmem:[%s225 + $0x1228] sm:$0xff]
        %v887 = vld [vmem:[%s225 + $0x1230] sm:$0xff]
        %v888 = vld [vmem:[%s225 + $0x1238] sm:$0xff]
        %v889 = vld [vmem:[%s225 + $0x1240] sm:$0xff]
        %v890 = vld [vmem:[%s225 + $0x1248] sm:$0xff]
        %v891 = vld [vmem:[%s225 + $0x1250] sm:$0xff]
        %v892 = vld [vmem:[%s225 + $0x1258] sm:$0xff]
        %v893 = vld [vmem:[%s225 + $0x1260] sm:$0xff]
        %v894 = vld [vmem:[%s225 + $0x1268] sm:$0xff]
        %v895 = vld [vmem:[%s225 + $0x1270] sm:$0xff]
        %v896 = vld [vmem:[%s225 + $0x1278] sm:$0xff]
        %v897 = vld [vmem:[%s225 + $0x1280] sm:$0xff]
        %v898 = vld [vmem:[%s225 + $0x1288] sm:$0xff]
        %v899 = vld [vmem:[%s225 + $0x1290] sm:$0xff]
        %v900 = vld [vmem:[%s225 + $0x1298] sm:$0xff]
        %v901 = vld [vmem:[%s225 + $0x12a0] sm:$0xff]
        %v902 = vld [vmem:[%s225 + $0x12a8] sm:$0xff]
        %v903 = vld [vmem:[%s225 + $0x12b0] sm:$0xff]
        %v904 = vld [vmem:[%s225 + $0x12b8] sm:$0xff]
        %v905 = vld [vmem:[%s225 + $0x12c0] sm:$0xff]
        %v906 = vld [vmem:[%s225 + $0x12c8] sm:$0xff]
        %v907 = vld [vmem:[%s225 + $0x12d0] sm:$0xff]
        %v908 = vld [vmem:[%s225 + $0x12d8] sm:$0xff]
        %v909 = vld [vmem:[%s225 + $0x12e0] sm:$0xff]
        %v910 = vld [vmem:[%s225 + $0x12e8] sm:$0xff]
        %v911 = vld [vmem:[%s225 + $0x12f0] sm:$0xff]
        %v912 = vld [vmem:[%s225 + $0x12f8] sm:$0xff]
        %v913 = vld [vmem:[%s225 + $0x1300] sm:$0xff]
        %v914 = vld [vmem:[%s225 + $0x1308] sm:$0xff]
        %v915 = vld [vmem:[%s225 + $0x1310] sm:$0xff]
        %v916 = vld [vmem:[%s225 + $0x1318] sm:$0xff]
        %v917 = vld [vmem:[%s225 + $0x1320] sm:$0xff]
        %v918 = vld [vmem:[%s225 + $0x1328] sm:$0xff]
        %v919 = vld [vmem:[%s225 + $0x1330] sm:$0xff]
        %v920 = vld [vmem:[%s225 + $0x1338] sm:$0xff]
        %v921 = vld [vmem:[%s225 + $0x1340] sm:$0xff]
        %v922 = vld [vmem:[%s225 + $0x1348] sm:$0xff]
        %v923 = vld [vmem:[%s225 + $0x1350] sm:$0xff]
        %v924 = vld [vmem:[%s225 + $0x1358] sm:$0xff]
        %v925 = vld [vmem:[%s225 + $0x1360] sm:$0xff]
        %v926 = vld [vmem:[%s225 + $0x1368] sm:$0xff]
        %v927 = vld [vmem:[%s225 + $0x1370] sm:$0xff]
        %v928 = vld [vmem:[%s225 + $0x1378] sm:$0xff]
        %v929 = vld [vmem:[%s225 + $0x1380] sm:$0xff]
        %v930 = vld [vmem:[%s225 + $0x1388] sm:$0xff]
        %v931 = vld [vmem:[%s225 + $0x1390] sm:$0xff]
        %v932 = vld [vmem:[%s225 + $0x1398] sm:$0xff]
        %v933 = vld [vmem:[%s225 + $0x13a0] sm:$0xff]
        %v934 = vld [vmem:[%s225 + $0x13a8] sm:$0xff]
        %v935 = vld [vmem:[%s225 + $0x13b0] sm:$0xff]
        %v936 = vld [vmem:[%s225 + $0x13b8] sm:$0xff]
        %v937 = vld [vmem:[%s225 + $0x13c0] sm:$0xff]
        %v938 = vld [vmem:[%s225 + $0x13c8] sm:$0xff]
        %v939 = vld [vmem:[%s225 + $0x13d0] sm:$0xff]
        %v940 = vld [vmem:[%s225 + $0x13d8] sm:$0xff]
        %v941 = vld [vmem:[%s225 + $0x13e0] sm:$0xff]
        %v942 = vld [vmem:[%s225 + $0x13e8] sm:$0xff]
        %v943 = vld [vmem:[%s225 + $0x13f0] sm:$0xff]
        %v944 = vld [vmem:[%s225 + $0x13f8] sm:$0xff]
        %v945 = vld [vmem:[%s225 + $0x1400] sm:$0xff]
        %v946 = vld [vmem:[%s225 + $0x1408] sm:$0xff]
        %v947 = vld [vmem:[%s225 + $0x1410] sm:$0xff]
        %v948 = vld [vmem:[%s225 + $0x1418] sm:$0xff]
        %v949 = vld [vmem:[%s225 + $0x1420] sm:$0xff]
        %v950 = vld [vmem:[%s225 + $0x1428] sm:$0xff]
        %v951 = vld [vmem:[%s225 + $0x1430] sm:$0xff]
        %v952 = vld [vmem:[%s225 + $0x1438] sm:$0xff]
        %v953 = vld [vmem:[%s225 + $0x1440] sm:$0xff]
        %v954 = vld [vmem:[%s225 + $0x1448] sm:$0xff]
        %v955 = vld [vmem:[%s225 + $0x1450] sm:$0xff]
        %v956 = vld [vmem:[%s225 + $0x1458] sm:$0xff]
        %v957 = vld [vmem:[%s225 + $0x1460] sm:$0xff]
        %v958 = vld [vmem:[%s225 + $0x1468] sm:$0xff]
        %v959 = vld [vmem:[%s225 + $0x1470] sm:$0xff]
        %v960 = vld [vmem:[%s225 + $0x1478] sm:$0xff]
        %v961 = vld [vmem:[%s225 + $0x1480] sm:$0xff]
        %v962 = vld [vmem:[%s225 + $0x1488] sm:$0xff]
        %v963 = vld [vmem:[%s225 + $0x1490] sm:$0xff]
        %v964 = vld [vmem:[%s225 + $0x1498] sm:$0xff]
        %v965 = vld [vmem:[%s225 + $0x14a0] sm:$0xff]
        %v966 = vld [vmem:[%s225 + $0x14a8] sm:$0xff]
        %v967 = vld [vmem:[%s225 + $0x14b0] sm:$0xff]
        %v968 = vld [vmem:[%s225 + $0x14b8] sm:$0xff]
        %v969 = vld [vmem:[%s225 + $0x14c0] sm:$0xff]
        %v970 = vld [vmem:[%s225 + $0x14c8] sm:$0xff]
        %v971 = vld [vmem:[%s225 + $0x14d0] sm:$0xff]
        %v972 = vld [vmem:[%s225 + $0x14d8] sm:$0xff]
        %v973 = vld [vmem:[%s225 + $0x14e0] sm:$0xff]
        %v974 = vld [vmem:[%s225 + $0x14e8] sm:$0xff]
        %v975 = vld [vmem:[%s225 + $0x14f0] sm:$0xff]
        %v976 = vld [vmem:[%s225 + $0x14f8] sm:$0xff]
        %v977 = vld [vmem:[%s225 + $0x1500] sm:$0xff]
        %v978 = vld [vmem:[%s225 + $0x1508] sm:$0xff]
        %v979 = vld [vmem:[%s225 + $0x1510] sm:$0xff]
        %v980 = vld [vmem:[%s225 + $0x1518] sm:$0xff]
        %v981 = vld [vmem:[%s225 + $0x1520] sm:$0xff]
        %v982 = vld [vmem:[%s225 + $0x1528] sm:$0xff]
        %v983 = vld [vmem:[%s225 + $0x1530] sm:$0xff]
        %v984 = vld [vmem:[%s225 + $0x1538] sm:$0xff]
        %v985 = vld [vmem:[%s225 + $0x1540] sm:$0xff]
        %v986 = vld [vmem:[%s225 + $0x1548] sm:$0xff]
        %v987 = vld [vmem:[%s225 + $0x1550] sm:$0xff]
        %v988 = vld [vmem:[%s225 + $0x1558] sm:$0xff]
        %v989 = vld [vmem:[%s225 + $0x1560] sm:$0xff]
        %v990 = vld [vmem:[%s225 + $0x1568] sm:$0xff]
        %v991 = vld [vmem:[%s225 + $0x1570] sm:$0xff]
        %v992 = vld [vmem:[%s225 + $0x1578] sm:$0xff]
        %v993 = vld [vmem:[%s225 + $0x1580] sm:$0xff]
        %v994 = vld [vmem:[%s225 + $0x1588] sm:$0xff]
        %v995 = vld [vmem:[%s225 + $0x1590] sm:$0xff]
        %v996 = vld [vmem:[%s225 + $0x1598] sm:$0xff]
        %v997 = vld [vmem:[%s225 + $0x15a0] sm:$0xff]
        %v998 = vld [vmem:[%s225 + $0x15a8] sm:$0xff]
        %v999 = vld [vmem:[%s225 + $0x15b0] sm:$0xff]
        %v1000 = vld [vmem:[%s225 + $0x15b8] sm:$0xff]
        %v1001 = vld [vmem:[%s225 + $0x15c0] sm:$0xff]
        %v1002 = vld [vmem:[%s225 + $0x15c8] sm:$0xff]
        %v1003 = vld [vmem:[%s225 + $0x15d0] sm:$0xff]
        %v1004 = vld [vmem:[%s225 + $0x15d8] sm:$0xff]
        %v1005 = vld [vmem:[%s225 + $0x15e0] sm:$0xff]
        %v1006 = vld [vmem:[%s225 + $0x15e8] sm:$0xff]
        %v1007 = vld [vmem:[%s225 + $0x15f0] sm:$0xff]
        %v1008 = vld [vmem:[%s225 + $0x15f8] sm:$0xff]
        %v1009 = vld [vmem:[%s225 + $0x1600] sm:$0xff]
        %v1010 = vld [vmem:[%s225 + $0x1608] sm:$0xff]
        %v1011 = vld [vmem:[%s225 + $0x1610] sm:$0xff]
        %v1012 = vld [vmem:[%s225 + $0x1618] sm:$0xff]
        %v1013 = vld [vmem:[%s225 + $0x1620] sm:$0xff]
        %v1014 = vld [vmem:[%s225 + $0x1628] sm:$0xff]
        %v1015 = vld [vmem:[%s225 + $0x1630] sm:$0xff]
        %v1016 = vld [vmem:[%s225 + $0x1638] sm:$0xff]
        %v1017 = vld [vmem:[%s225 + $0x1640] sm:$0xff]
        %v1018 = vld [vmem:[%s225 + $0x1648] sm:$0xff]
        %v1019 = vld [vmem:[%s225 + $0x1650] sm:$0xff]
        %v1020 = vld [vmem:[%s225 + $0x1658] sm:$0xff]
        %v1021 = vld [vmem:[%s225 + $0x1660] sm:$0xff]
        %v1022 = vld [vmem:[%s225 + $0x1668] sm:$0xff]
        %v1023 = vld [vmem:[%s225 + $0x1670] sm:$0xff]
        %v1024 = vld [vmem:[%s225 + $0x1678] sm:$0xff]
        %v1025 = vld [vmem:[%s225 + $0x1680] sm:$0xff]
        %v1026 = vld [vmem:[%s225 + $0x1688] sm:$0xff]
        %v1027 = vld [vmem:[%s225 + $0x1690] sm:$0xff]
        %v1028 = vld [vmem:[%s225 + $0x1698] sm:$0xff]
        %v1029 = vld [vmem:[%s225 + $0x16a0] sm:$0xff]
        %v1030 = vld [vmem:[%s225 + $0x16a8] sm:$0xff]
        %v1031 = vld [vmem:[%s225 + $0x16b0] sm:$0xff]
        %v1032 = vld [vmem:[%s225 + $0x16b8] sm:$0xff]
        %v1033 = vld [vmem:[%s225 + $0x16c0] sm:$0xff]
        %v1034 = vld [vmem:[%s225 + $0x16c8] sm:$0xff]
        %v1035 = vld [vmem:[%s225 + $0x16d0] sm:$0xff]
        %v1036 = vld [vmem:[%s225 + $0x16d8] sm:$0xff]
        %v1037 = vld [vmem:[%s225 + $0x16e0] sm:$0xff]
        %v1038 = vld [vmem:[%s225 + $0x16e8] sm:$0xff]
        %v1039 = vld [vmem:[%s225 + $0x16f0] sm:$0xff]
        %v1040 = vld [vmem:[%s225 + $0x16f8] sm:$0xff]
        %v1041 = vld [vmem:[%s225 + $0x1700] sm:$0xff]
        %v1042 = vld [vmem:[%s225 + $0x1708] sm:$0xff]
        %v1043 = vld [vmem:[%s225 + $0x1710] sm:$0xff]
        %v1044 = vld [vmem:[%s225 + $0x1718] sm:$0xff]
        %v1045 = vld [vmem:[%s225 + $0x1720] sm:$0xff]
        %v1046 = vld [vmem:[%s225 + $0x1728] sm:$0xff]
        %v1047 = vld [vmem:[%s225 + $0x1730] sm:$0xff]
        %v1048 = vld [vmem:[%s225 + $0x1738] sm:$0xff]
        %v1049 = vld [vmem:[%s225 + $0x1740] sm:$0xff]
        %v1050 = vld [vmem:[%s225 + $0x1748] sm:$0xff]
        %v1051 = vld [vmem:[%s225 + $0x1750] sm:$0xff]
        %v1052 = vld [vmem:[%s225 + $0x1758] sm:$0xff]
        %v1053 = vld [vmem:[%s225 + $0x1760] sm:$0xff]
        %v1054 = vld [vmem:[%s225 + $0x1768] sm:$0xff]
        %v1055 = vld [vmem:[%s225 + $0x1770] sm:$0xff]
        %v1056 = vld [vmem:[%s225 + $0x1778] sm:$0xff]
        %v1057 = vld [vmem:[%s225 + $0x1780] sm:$0xff]
        %v1058 = vld [vmem:[%s225 + $0x1788] sm:$0xff]
        %v1059 = vld [vmem:[%s225 + $0x1790] sm:$0xff]
        %v1060 = vld [vmem:[%s225 + $0x1798] sm:$0xff]
        %v1061 = vld [vmem:[%s225 + $0x17a0] sm:$0xff]
        %v1062 = vld [vmem:[%s225 + $0x17a8] sm:$0xff]
        %v1063 = vld [vmem:[%s225 + $0x17b0] sm:$0xff]
        %v1064 = vld [vmem:[%s225 + $0x17b8] sm:$0xff]
        %v1065 = vld [vmem:[%s225 + $0x17c0] sm:$0xff]
        %v1066 = vld [vmem:[%s225 + $0x17c8] sm:$0xff]
        %v1067 = vld [vmem:[%s225 + $0x17d0] sm:$0xff]
        %v1068 = vld [vmem:[%s225 + $0x17d8] sm:$0xff]
        %v1069 = vld [vmem:[%s225 + $0x17e0] sm:$0xff]
        %v1070 = vld [vmem:[%s225 + $0x17e8] sm:$0xff]
        %v1071 = vld [vmem:[%s225 + $0x17f0] sm:$0xff]
        %v1072 = vld [vmem:[%s225 + $0x17f8] sm:$0xff]
        %v1073 = vld [vmem:[%s225 + $0x1800] sm:$0xff]
        %v1074 = vld [vmem:[%s225 + $0x1808] sm:$0xff]
        %v1075 = vld [vmem:[%s225 + $0x1810] sm:$0xff]
        %v1076 = vld [vmem:[%s225 + $0x1818] sm:$0xff]
        %v1077 = vld [vmem:[%s225 + $0x1820] sm:$0xff]
        %v1078 = vld [vmem:[%s225 + $0x1828] sm:$0xff]
        %v1079 = vld [vmem:[%s225 + $0x1830] sm:$0xff]
        %v1080 = vld [vmem:[%s225 + $0x1838] sm:$0xff]
        %v1081 = vld [vmem:[%s225 + $0x1840] sm:$0xff]
        %v1082 = vld [vmem:[%s225 + $0x1848] sm:$0xff]
        %v1083 = vld [vmem:[%s225 + $0x1850] sm:$0xff]
        %v1084 = vld [vmem:[%s225 + $0x1858] sm:$0xff]
        %v1085 = vld [vmem:[%s225 + $0x1860] sm:$0xff]
        %v1086 = vld [vmem:[%s225 + $0x1868] sm:$0xff]
        %v1087 = vld [vmem:[%s225 + $0x1870] sm:$0xff]
        %v1088 = vld [vmem:[%s225 + $0x1878] sm:$0xff]
        %v1089 = vld [vmem:[%s225 + $0x1880] sm:$0xff]
        %v1090 = vld [vmem:[%s225 + $0x1888] sm:$0xff]
        %v1091 = vld [vmem:[%s225 + $0x1890] sm:$0xff]
        %v1092 = vld [vmem:[%s225 + $0x1898] sm:$0xff]
        %v1093 = vld [vmem:[%s225 + $0x18a0] sm:$0xff]
        %v1094 = vld [vmem:[%s225 + $0x18a8] sm:$0xff]
        %v1095 = vld [vmem:[%s225 + $0x18b0] sm:$0xff]
        %v1096 = vld [vmem:[%s225 + $0x18b8] sm:$0xff]
        %v1097 = vld [vmem:[%s225 + $0x18c0] sm:$0xff]
        %v1098 = vld [vmem:[%s225 + $0x18c8] sm:$0xff]
        %v1099 = vld [vmem:[%s225 + $0x18d0] sm:$0xff]
        %v1100 = vld [vmem:[%s225 + $0x18d8] sm:$0xff]
        %v1101 = vld [vmem:[%s225 + $0x18e0] sm:$0xff]
        %v1102 = vld [vmem:[%s225 + $0x18e8] sm:$0xff]
        %v1103 = vld [vmem:[%s225 + $0x18f0] sm:$0xff]
        %v1104 = vld [vmem:[%s225 + $0x18f8] sm:$0xff]
        %v1105 = vld [vmem:[%s225 + $0x1900] sm:$0xff]
        %v1106 = vld [vmem:[%s225 + $0x1908] sm:$0xff]
        %v1107 = vld [vmem:[%s225 + $0x1910] sm:$0xff]
        %v1108 = vld [vmem:[%s225 + $0x1918] sm:$0xff]
        %v1109 = vld [vmem:[%s225 + $0x1920] sm:$0xff]
        %v1110 = vld [vmem:[%s225 + $0x1928] sm:$0xff]
        %v1111 = vld [vmem:[%s225 + $0x1930] sm:$0xff]
        %v1112 = vld [vmem:[%s225 + $0x1938] sm:$0xff]
        %v1113 = vld [vmem:[%s225 + $0x1940] sm:$0xff]
        %v1114 = vld [vmem:[%s225 + $0x1948] sm:$0xff]
        %v1115 = vld [vmem:[%s225 + $0x1950] sm:$0xff]
        %v1116 = vld [vmem:[%s225 + $0x1958] sm:$0xff]
        %v1117 = vld [vmem:[%s225 + $0x1960] sm:$0xff]
        %v1118 = vld [vmem:[%s225 + $0x1968] sm:$0xff]
        %v1119 = vld [vmem:[%s225 + $0x1970] sm:$0xff]
        %v1120 = vld [vmem:[%s225 + $0x1978] sm:$0xff]
        %v1121 = vld [vmem:[%s225 + $0x1980] sm:$0xff]
        %v1122 = vld [vmem:[%s225 + $0x1988] sm:$0xff]
        %v1123 = vld [vmem:[%s225 + $0x1990] sm:$0xff]
        %v1124 = vld [vmem:[%s225 + $0x1998] sm:$0xff]
        %v1125 = vld [vmem:[%s225 + $0x19a0] sm:$0xff]
        %v1126 = vld [vmem:[%s225 + $0x19a8] sm:$0xff]
        %v1127 = vld [vmem:[%s225 + $0x19b0] sm:$0xff]
        %v1128 = vld [vmem:[%s225 + $0x19b8] sm:$0xff]
        %v1129 = vld [vmem:[%s225 + $0x19c0] sm:$0xff]
        %v1130 = vld [vmem:[%s225 + $0x19c8] sm:$0xff]
        %v1131 = vld [vmem:[%s225 + $0x19d0] sm:$0xff]
        %v1132 = vld [vmem:[%s225 + $0x19d8] sm:$0xff]
        %v1133 = vld [vmem:[%s225 + $0x19e0] sm:$0xff]
        %v1134 = vld [vmem:[%s225 + $0x19e8] sm:$0xff]
        %v1135 = vld [vmem:[%s225 + $0x19f0] sm:$0xff]
        %v1136 = vld [vmem:[%s225 + $0x19f8] sm:$0xff]
        %v1137 = vld [vmem:[%s225 + $0x1a00] sm:$0xff]
        %v1138 = vld [vmem:[%s225 + $0x1a08] sm:$0xff]
        %v1139 = vld [vmem:[%s225 + $0x1a10] sm:$0xff]
        %v1140 = vld [vmem:[%s225 + $0x1a18] sm:$0xff]
        %v1141 = vld [vmem:[%s225 + $0x1a20] sm:$0xff]
        %v1142 = vld [vmem:[%s225 + $0x1a28] sm:$0xff]
        %v1143 = vld [vmem:[%s225 + $0x1a30] sm:$0xff]
        %v1144 = vld [vmem:[%s225 + $0x1a38] sm:$0xff]
        %v1145 = vld [vmem:[%s225 + $0x1a40] sm:$0xff]
        %v1146 = vld [vmem:[%s225 + $0x1a48] sm:$0xff]
        %v1147 = vld [vmem:[%s225 + $0x1a50] sm:$0xff]
        %v1148 = vld [vmem:[%s225 + $0x1a58] sm:$0xff]
        %v1149 = vld [vmem:[%s225 + $0x1a60] sm:$0xff]
        %v1150 = vld [vmem:[%s225 + $0x1a68] sm:$0xff]
        %v1151 = vld [vmem:[%s225 + $0x1a70] sm:$0xff]
        %v1152 = vld [vmem:[%s225 + $0x1a78] sm:$0xff]
        %v1153 = vld [vmem:[%s225 + $0x1a80] sm:$0xff]
        %v1154 = vld [vmem:[%s225 + $0x1a88] sm:$0xff]
        %v1155 = vld [vmem:[%s225 + $0x1a90] sm:$0xff]
        %v1156 = vld [vmem:[%s225 + $0x1a98] sm:$0xff]
        %v1157 = vld [vmem:[%s225 + $0x1aa0] sm:$0xff]
        %v1158 = vld [vmem:[%s225 + $0x1aa8] sm:$0xff]
        %v1159 = vld [vmem:[%s225 + $0x1ab0] sm:$0xff]
        %v1160 = vld [vmem:[%s225 + $0x1ab8] sm:$0xff]
        %v1161 = vld [vmem:[%s225 + $0x1ac0] sm:$0xff]
        %v1162 = vld [vmem:[%s225 + $0x1ac8] sm:$0xff]
        %v1163 = vld [vmem:[%s225 + $0x1ad0] sm:$0xff]
        %v1164 = vld [vmem:[%s225 + $0x1ad8] sm:$0xff]
        %v1165 = vld [vmem:[%s225 + $0x1ae0] sm:$0xff]
        %v1166 = vld [vmem:[%s225 + $0x1ae8] sm:$0xff]
        %v1167 = vld [vmem:[%s225 + $0x1af0] sm:$0xff]
        %v1168 = vld [vmem:[%s225 + $0x1af8] sm:$0xff]
        %v1169 = vld [vmem:[%s225 + $0x1b00] sm:$0xff]
        %v1170 = vld [vmem:[%s225 + $0x1b08] sm:$0xff]
        %v1171 = vld [vmem:[%s225 + $0x1b10] sm:$0xff]
        %v1172 = vld [vmem:[%s225 + $0x1b18] sm:$0xff]
        %v1173 = vld [vmem:[%s225 + $0x1b20] sm:$0xff]
        %v1174 = vld [vmem:[%s225 + $0x1b28] sm:$0xff]
        %v1175 = vld [vmem:[%s225 + $0x1b30] sm:$0xff]
        %v1176 = vld [vmem:[%s225 + $0x1b38] sm:$0xff]
        %v1177 = vld [vmem:[%s225 + $0x1b40] sm:$0xff]
        %v1178 = vld [vmem:[%s225 + $0x1b48] sm:$0xff]
        %v1179 = vld [vmem:[%s225 + $0x1b50] sm:$0xff]
        %v1180 = vld [vmem:[%s225 + $0x1b58] sm:$0xff]
        %v1181 = vld [vmem:[%s225 + $0x1b60] sm:$0xff]
        %v1182 = vld [vmem:[%s225 + $0x1b68] sm:$0xff]
        %v1183 = vld [vmem:[%s225 + $0x1b70] sm:$0xff]
        %v1184 = vld [vmem:[%s225 + $0x1b78] sm:$0xff]
        %v1185 = vld [vmem:[%s225 + $0x1b80] sm:$0xff]
        %v1186 = vld [vmem:[%s225 + $0x1b88] sm:$0xff]
        %v1187 = vld [vmem:[%s225 + $0x1b90] sm:$0xff]
        %v1188 = vld [vmem:[%s225 + $0x1b98] sm:$0xff]
        %v1189 = vld [vmem:[%s225 + $0x1ba0] sm:$0xff]
        %v1190 = vld [vmem:[%s225 + $0x1ba8] sm:$0xff]
        %v1191 = vld [vmem:[%s225 + $0x1bb0] sm:$0xff]
        %v1192 = vld [vmem:[%s225 + $0x1bb8] sm:$0xff]
        %v1193 = vld [vmem:[%s225 + $0x1bc0] sm:$0xff]
        %v1194 = vld [vmem:[%s225 + $0x1bc8] sm:$0xff]
        %v1195 = vld [vmem:[%s225 + $0x1bd0] sm:$0xff]
        %v1196 = vld [vmem:[%s225 + $0x1bd8] sm:$0xff]
        %v1197 = vld [vmem:[%s225 + $0x1be0] sm:$0xff]
        %v1198 = vld [vmem:[%s225 + $0x1be8] sm:$0xff]
        %v1199 = vld [vmem:[%s225 + $0x1bf0] sm:$0xff]
        %v1200 = vld [vmem:[%s225 + $0x1bf8] sm:$0xff]
        %v1201 = vld [vmem:[%s225 + $0x1c00] sm:$0xff]
        %v1202 = vld [vmem:[%s225 + $0x1c08] sm:$0xff]
        %v1203 = vld [vmem:[%s225 + $0x1c10] sm:$0xff]
        %v1204 = vld [vmem:[%s225 + $0x1c18] sm:$0xff]
        %v1205 = vld [vmem:[%s225 + $0x1c20] sm:$0xff]
        %v1206 = vld [vmem:[%s225 + $0x1c28] sm:$0xff]
        %v1207 = vld [vmem:[%s225 + $0x1c30] sm:$0xff]
        %v1208 = vld [vmem:[%s225 + $0x1c38] sm:$0xff]
        %v1209 = vld [vmem:[%s225 + $0x1c40] sm:$0xff]
        %v1210 = vld [vmem:[%s225 + $0x1c48] sm:$0xff]
        %v1211 = vld [vmem:[%s225 + $0x1c50] sm:$0xff]
        %v1212 = vld [vmem:[%s225 + $0x1c58] sm:$0xff]
        %v1213 = vld [vmem:[%s225 + $0x1c60] sm:$0xff]
        %v1214 = vld [vmem:[%s225 + $0x1c68] sm:$0xff]
        %v1215 = vld [vmem:[%s225 + $0x1c70] sm:$0xff]
        %v1216 = vld [vmem:[%s225 + $0x1c78] sm:$0xff]
        %v1217 = vld [vmem:[%s225 + $0x1c80] sm:$0xff]
        %v1218 = vld [vmem:[%s225 + $0x1c88] sm:$0xff]
        %v1219 = vld [vmem:[%s225 + $0x1c90] sm:$0xff]
        %v1220 = vld [vmem:[%s225 + $0x1c98] sm:$0xff]
        %v1221 = vld [vmem:[%s225 + $0x1ca0] sm:$0xff]
        %v1222 = vld [vmem:[%s225 + $0x1ca8] sm:$0xff]
        %v1223 = vld [vmem:[%s225 + $0x1cb0] sm:$0xff]
        %v1224 = vld [vmem:[%s225 + $0x1cb8] sm:$0xff]
        %v1225 = vld [vmem:[%s225 + $0x1cc0] sm:$0xff]
        %v1226 = vld [vmem:[%s225 + $0x1cc8] sm:$0xff]
        %v1227 = vld [vmem:[%s225 + $0x1cd0] sm:$0xff]
        %v1228 = vld [vmem:[%s225 + $0x1cd8] sm:$0xff]
        %v1229 = vld [vmem:[%s225 + $0x1ce0] sm:$0xff]
        %v1230 = vld [vmem:[%s225 + $0x1ce8] sm:$0xff]
        %v1231 = vld [vmem:[%s225 + $0x1cf0] sm:$0xff]
        %v1232 = vld [vmem:[%s225 + $0x1cf8] sm:$0xff]
        %v1233 = vld [vmem:[%s225 + $0x1d00] sm:$0xff]
        %v1234 = vld [vmem:[%s225 + $0x1d08] sm:$0xff]
        %v1235 = vld [vmem:[%s225 + $0x1d10] sm:$0xff]
        %v1236 = vld [vmem:[%s225 + $0x1d18] sm:$0xff]
        %v1237 = vld [vmem:[%s225 + $0x1d20] sm:$0xff]
        %v1238 = vld [vmem:[%s225 + $0x1d28] sm:$0xff]
        %v1239 = vld [vmem:[%s225 + $0x1d30] sm:$0xff]
        %v1240 = vld [vmem:[%s225 + $0x1d38] sm:$0xff]
        %v1241 = vld [vmem:[%s225 + $0x1d40] sm:$0xff]
        %v1242 = vld [vmem:[%s225 + $0x1d48] sm:$0xff]
        %v1243 = vld [vmem:[%s225 + $0x1d50] sm:$0xff]
        %v1244 = vld [vmem:[%s225 + $0x1d58] sm:$0xff]
        %v1245 = vld [vmem:[%s225 + $0x1d60] sm:$0xff]
        %v1246 = vld [vmem:[%s225 + $0x1d68] sm:$0xff]
        %v1247 = vld [vmem:[%s225 + $0x1d70] sm:$0xff]
        %v1248 = vld [vmem:[%s225 + $0x1d78] sm:$0xff]
        %v1249 = vld [vmem:[%s225 + $0x1d80] sm:$0xff]
        %v1250 = vld [vmem:[%s225 + $0x1d88] sm:$0xff]
        %v1251 = vld [vmem:[%s225 + $0x1d90] sm:$0xff]
        %v1252 = vld [vmem:[%s225 + $0x1d98] sm:$0xff]
        %v1253 = vld [vmem:[%s225 + $0x1da0] sm:$0xff]
        %v1254 = vld [vmem:[%s225 + $0x1da8] sm:$0xff]
        %v1255 = vld [vmem:[%s225 + $0x1db0] sm:$0xff]
        %v1256 = vld [vmem:[%s225 + $0x1db8] sm:$0xff]
        %v1257 = vld [vmem:[%s225 + $0x1dc0] sm:$0xff]
        %v1258 = vld [vmem:[%s225 + $0x1dc8] sm:$0xff]
        %v1259 = vld [vmem:[%s225 + $0x1dd0] sm:$0xff]
        %v1260 = vld [vmem:[%s225 + $0x1dd8] sm:$0xff]
        %v1261 = vld [vmem:[%s225 + $0x1de0] sm:$0xff]
        %v1262 = vld [vmem:[%s225 + $0x1de8] sm:$0xff]
        %v1263 = vld [vmem:[%s225 + $0x1df0] sm:$0xff]
        %v1264 = vld [vmem:[%s225 + $0x1df8] sm:$0xff]
        %v1265 = vld [vmem:[%s225 + $0x1e00] sm:$0xff]
        %v1266 = vld [vmem:[%s225 + $0x1e08] sm:$0xff]
        %v1267 = vld [vmem:[%s225 + $0x1e10] sm:$0xff]
        %v1268 = vld [vmem:[%s225 + $0x1e18] sm:$0xff]
        %v1269 = vld [vmem:[%s225 + $0x1e20] sm:$0xff]
        %v1270 = vld [vmem:[%s225 + $0x1e28] sm:$0xff]
        %v1271 = vld [vmem:[%s225 + $0x1e30] sm:$0xff]
        %v1272 = vld [vmem:[%s225 + $0x1e38] sm:$0xff]
        %v1273 = vld [vmem:[%s225 + $0x1e40] sm:$0xff]
        %v1274 = vld [vmem:[%s225 + $0x1e48] sm:$0xff]
        %v1275 = vld [vmem:[%s225 + $0x1e50] sm:$0xff]
        %v1276 = vld [vmem:[%s225 + $0x1e58] sm:$0xff]
        %v1277 = vld [vmem:[%s225 + $0x1e60] sm:$0xff]
        %v1278 = vld [vmem:[%s225 + $0x1e68] sm:$0xff]
        %v1279 = vld [vmem:[%s225 + $0x1e70] sm:$0xff]
        %v1280 = vld [vmem:[%s225 + $0x1e78] sm:$0xff]
        %v1281 = vld [vmem:[%s225 + $0x1e80] sm:$0xff]
        %v1282 = vld [vmem:[%s225 + $0x1e88] sm:$0xff]
        %v1283 = vld [vmem:[%s225 + $0x1e90] sm:$0xff]
        %v1284 = vld [vmem:[%s225 + $0x1e98] sm:$0xff]
        %v1285 = vld [vmem:[%s225 + $0x1ea0] sm:$0xff]
        %v1286 = vld [vmem:[%s225 + $0x1ea8] sm:$0xff]
        %v1287 = vld [vmem:[%s225 + $0x1eb0] sm:$0xff]
        %v1288 = vld [vmem:[%s225 + $0x1eb8] sm:$0xff]
        %v1289 = vld [vmem:[%s225 + $0x1ec0] sm:$0xff]
        %v1290 = vld [vmem:[%s225 + $0x1ec8] sm:$0xff]
        %v1291 = vld [vmem:[%s225 + $0x1ed0] sm:$0xff]
        %v1292 = vld [vmem:[%s225 + $0x1ed8] sm:$0xff]
        %v1293 = vld [vmem:[%s225 + $0x1ee0] sm:$0xff]
        %v1294 = vld [vmem:[%s225 + $0x1ee8] sm:$0xff]
        %v1295 = vld [vmem:[%s225 + $0x1ef0] sm:$0xff]
        %v1296 = vld [vmem:[%s225 + $0x1ef8] sm:$0xff]
        %v1297 = vld [vmem:[%s225 + $0x1f00] sm:$0xff]
        %v1298 = vld [vmem:[%s225 + $0x1f08] sm:$0xff]
        %v1299 = vld [vmem:[%s225 + $0x1f10] sm:$0xff]
        %v1300 = vld [vmem:[%s225 + $0x1f18] sm:$0xff]
        %v1301 = vld [vmem:[%s225 + $0x1f20] sm:$0xff]
        %v1302 = vld [vmem:[%s225 + $0x1f28] sm:$0xff]
        %v1303 = vld [vmem:[%s225 + $0x1f30] sm:$0xff]
        %v1304 = vld [vmem:[%s225 + $0x1f38] sm:$0xff]
        %v1305 = vld [vmem:[%s225 + $0x1f40] sm:$0xff]
        %v1306 = vld [vmem:[%s225 + $0x1f48] sm:$0xff]
        %v1307 = vld [vmem:[%s225 + $0x1f50] sm:$0xff]
        %v1308 = vld [vmem:[%s225 + $0x1f58] sm:$0xff]
        %v1309 = vld [vmem:[%s225 + $0x1f60] sm:$0xff]
        %v1310 = vld [vmem:[%s225 + $0x1f68] sm:$0xff]
        %v1311 = vld [vmem:[%s225 + $0x1f70] sm:$0xff]
        %v1312 = vld [vmem:[%s225 + $0x1f78] sm:$0xff]
        %v1313 = vld [vmem:[%s225 + $0x1f80] sm:$0xff]
        %v1314 = vld [vmem:[%s225 + $0x1f88] sm:$0xff]
        %v1315 = vld [vmem:[%s225 + $0x1f90] sm:$0xff]
        %v1316 = vld [vmem:[%s225 + $0x1f98] sm:$0xff]
        %v1317 = vld [vmem:[%s225 + $0x1fa0] sm:$0xff]
        %v1318 = vld [vmem:[%s225 + $0x1fa8] sm:$0xff]
        %v1319 = vld [vmem:[%s225 + $0x1fb0] sm:$0xff]
        %v1320 = vld [vmem:[%s225 + $0x1fb8] sm:$0xff]
        %v1321 = vld [vmem:[%s225 + $0x1fc0] sm:$0xff]
        %v1322 = vld [vmem:[%s225 + $0x1fc8] sm:$0xff]
        %v1323 = vld [vmem:[%s225 + $0x1fd0] sm:$0xff]
        %v1324 = vld [vmem:[%s225 + $0x1fd8] sm:$0xff]
        %v1325 = vld [vmem:[%s225 + $0x1fe0] sm:$0xff]
        %v1326 = vld [vmem:[%s225 + $0x1fe8] sm:$0xff]
        %v1327 = vld [vmem:[%s225 + $0x1ff0] sm:$0xff]
        %v1328 = vld [vmem:[%s225 + $0x1ff8] sm:$0xff]
        %v1337 = vcombine.high %v297, %v297
        %v1338 = vcombine.high %v298, %v298
        %v1339 = vcombine.high %v299, %v299
        %v1340 = vcombine.high %v300, %v300
        %v1341 = vcombine.high %v301, %v301
        %v1342 = vcombine.high %v302, %v302
        %v1343 = vcombine.high %v303, %v303
        %v1344 = vcombine.high %v304, %v304
        %1353 = vmatprep.subr.mxu0 %v366
        %1354 = vmatpush1.msra.mxu0 %v365
        %1355 = vmatprep.subr.mxu0 %v362
        %1356 = vmatpush1.msra.mxu0 %v361
        %1357 = vmatprep.subr.mxu0 %v358
        %1358 = vmatpush1.msra.mxu0 %v357
        %1359 = vmatprep.subr.mxu0 %v354
        %1360 = vmatpush1.msra.mxu0 %v353
        %1361 = vmatprep.subr.mxu0 %v350
        %1362 = vmatpush1.msra.mxu0 %v349
        %1363 = vmatprep.subr.mxu0 %v346
        %1364 = vmatpush1.msra.mxu0 %v345
        %1365 = vmatprep.subr.mxu0 %v342
        %1366 = vmatpush1.msra.mxu0 %v341
        %1367 = vmatprep.subr.mxu0 %v338
        %1368 = vmatpush1.msra.mxu0 %v337
        %1369 = vmatprep.subr.mxu0 %v334
        %1370 = vmatpush1.msra.mxu0 %v333
        %1371 = vmatprep.subr.mxu0 %v330
        %1372 = vmatpush1.msra.mxu0 %v329
        %1373 = vmatprep.subr.mxu0 %v326
        %1374 = vmatpush1.msra.mxu0 %v325
        %1375 = vmatprep.subr.mxu0 %v322
        %1376 = vmatpush1.msra.mxu0 %v321
        %1377 = vmatprep.subr.mxu0 %v318
        %1378 = vmatpush1.msra.mxu0 %v317
        %1379 = vmatprep.subr.mxu0 %v314
        %1380 = vmatpush1.msra.mxu0 %v313
        %1381 = vmatprep.subr.mxu0 %v310
        %1382 = vmatpush1.msra.mxu0 %v309
        %1383 = vmatprep.subr.mxu0 %v306
        %1384 = vmatpush1.msra.mxu0 %v305
        %1385 = vmatprep.subr.mxu0 %v430
        %1386 = vmatpush2.msra.mxu0 %v429
        %1387 = vmatprep.subr.mxu0 %v426
        %1388 = vmatpush2.msra.mxu0 %v425
        %1389 = vmatprep.subr.mxu0 %v422
        %1390 = vmatpush2.msra.mxu0 %v421
        %1391 = vmatprep.subr.mxu0 %v418
        %1392 = vmatpush2.msra.mxu0 %v417
        %1393 = vmatprep.subr.mxu0 %v414
        %1394 = vmatpush2.msra.mxu0 %v413
        %1395 = vmatprep.subr.mxu0 %v410
        %1396 = vmatpush2.msra.mxu0 %v409
        %1397 = vmatprep.subr.mxu0 %v406
        %1398 = vmatpush2.msra.mxu0 %v405
        %1399 = vmatprep.subr.mxu0 %v402
        %1400 = vmatpush2.msra.mxu0 %v401
        %1401 = vmatprep.subr.mxu0 %v398
        %1402 = vmatpush2.msra.mxu0 %v397
        %1403 = vmatprep.subr.mxu0 %v394
        %1404 = vmatpush2.msra.mxu0 %v393
        %1405 = vmatprep.subr.mxu0 %v390
        %1406 = vmatpush2.msra.mxu0 %v389
        %1407 = vmatprep.subr.mxu0 %v386
        %1408 = vmatpush2.msra.mxu0 %v385
        %1409 = vmatprep.subr.mxu0 %v382
        %1410 = vmatpush2.msra.mxu0 %v381
        %1411 = vmatprep.subr.mxu0 %v378
        %1412 = vmatpush2.msra.mxu0 %v377
        %1413 = vmatprep.subr.mxu0 %v374
        %1414 = vmatpush2.msra.mxu0 %v373
        %1415 = vmatprep.subr.mxu0 %v370
        %1416 = vmatpush2.msra.mxu0 %v369
        %1417 = vmatprep.mubr.f32.mxu0 %v1337
        %1418 = vmatmul.mubr.f32.gmra.mxu0 %v297
        %v1419 = vpop.f32.mrf.mxu0
        %v1420 = vadd.f32 0.0, %v1419
        %v1421 = vpop.f32.mrf.mxu0
        %v1422 = vadd.f32 0.0, %v1421
        %1423 = vdwg.mxu0
        %1424 = vmatprep.subr.mxu0 %v494
        %1425 = vmatpush1.msra.mxu0 %v493
        %1426 = vmatprep.subr.mxu0 %v490
        %1427 = vmatpush1.msra.mxu0 %v489
        %1428 = vmatprep.subr.mxu0 %v486
        %1429 = vmatpush1.msra.mxu0 %v485
        %1430 = vmatprep.subr.mxu0 %v482
        %1431 = vmatpush1.msra.mxu0 %v481
        %1432 = vmatprep.subr.mxu0 %v478
        %1433 = vmatpush1.msra.mxu0 %v477
        %1434 = vmatprep.subr.mxu0 %v474
        %1435 = vmatpush1.msra.mxu0 %v473
        %1436 = vmatprep.subr.mxu0 %v470
        %1437 = vmatpush1.msra.mxu0 %v469
        %1438 = vmatprep.subr.mxu0 %v466
        %1439 = vmatpush1.msra.mxu0 %v465
        %1440 = vmatprep.subr.mxu0 %v462
        %1441 = vmatpush1.msra.mxu0 %v461
        %1442 = vmatprep.subr.mxu0 %v458
        %1443 = vmatpush1.msra.mxu0 %v457
        %1444 = vmatprep.subr.mxu0 %v454
        %1445 = vmatpush1.msra.mxu0 %v453
        %1446 = vmatprep.subr.mxu0 %v450
        %1447 = vmatpush1.msra.mxu0 %v449
        %1448 = vmatprep.subr.mxu0 %v446
        %1449 = vmatpush1.msra.mxu0 %v445
        %1450 = vmatprep.subr.mxu0 %v442
        %1451 = vmatpush1.msra.mxu0 %v441
        %1452 = vmatprep.subr.mxu0 %v438
        %1453 = vmatpush1.msra.mxu0 %v437
        %1454 = vmatprep.subr.mxu0 %v434
        %1455 = vmatpush1.msra.mxu0 %v433
        %1456 = vmatprep.subr.mxu0 %v558
        %1457 = vmatpush2.msra.mxu0 %v557
        %1458 = vmatprep.subr.mxu0 %v554
        %1459 = vmatpush2.msra.mxu0 %v553
        %1460 = vmatprep.subr.mxu0 %v550
        %1461 = vmatpush2.msra.mxu0 %v549
        %1462 = vmatprep.subr.mxu0 %v546
        %1463 = vmatpush2.msra.mxu0 %v545
        %1464 = vmatprep.subr.mxu0 %v542
        %1465 = vmatpush2.msra.mxu0 %v541
        %1466 = vmatprep.subr.mxu0 %v538
        %1467 = vmatpush2.msra.mxu0 %v537
        %1468 = vmatprep.subr.mxu0 %v534
        %1469 = vmatpush2.msra.mxu0 %v533
        %1470 = vmatprep.subr.mxu0 %v530
        %1471 = vmatpush2.msra.mxu0 %v529
        %1472 = vmatprep.subr.mxu0 %v526
        %1473 = vmatpush2.msra.mxu0 %v525
        %1474 = vmatprep.subr.mxu0 %v522
        %1475 = vmatpush2.msra.mxu0 %v521
        %1476 = vmatprep.subr.mxu0 %v518
        %1477 = vmatpush2.msra.mxu0 %v517
        %1478 = vmatprep.subr.mxu0 %v514
        %1479 = vmatpush2.msra.mxu0 %v513
        %1480 = vmatprep.subr.mxu0 %v510
        %1481 = vmatpush2.msra.mxu0 %v509
        %1482 = vmatprep.subr.mxu0 %v506
        %1483 = vmatpush2.msra.mxu0 %v505
        %1484 = vmatprep.subr.mxu0 %v502
        %1485 = vmatpush2.msra.mxu0 %v501
        %1486 = vmatprep.subr.mxu0 %v498
        %1487 = vmatpush2.msra.mxu0 %v497
        %1488 = vmatprep.mubr.f32.mxu0 %v1338
        %1489 = vmatmul.mubr.f32.gmra.mxu0 %v298
        %v1490 = vpop.f32.mrf.mxu0
        %v1491 = vadd.f32 %v1420, %v1490
        %v1492 = vpop.f32.mrf.mxu0
        %v1493 = vadd.f32 %v1422, %v1492
        %1494 = vdwg.mxu0
        %1495 = vmatprep.subr.mxu0 %v622
        %1496 = vmatpush1.msra.mxu0 %v621
        %1497 = vmatprep.subr.mxu0 %v618
        %1498 = vmatpush1.msra.mxu0 %v617
        %1499 = vmatprep.subr.mxu0 %v614
        %1500 = vmatpush1.msra.mxu0 %v613
        %1501 = vmatprep.subr.mxu0 %v610
        %1502 = vmatpush1.msra.mxu0 %v609
        %1503 = vmatprep.subr.mxu0 %v606
        %1504 = vmatpush1.msra.mxu0 %v605
        %1505 = vmatprep.subr.mxu0 %v602
        %1506 = vmatpush1.msra.mxu0 %v601
        %1507 = vmatprep.subr.mxu0 %v598
        %1508 = vmatpush1.msra.mxu0 %v597
        %1509 = vmatprep.subr.mxu0 %v594
        %1510 = vmatpush1.msra.mxu0 %v593
        %1511 = vmatprep.subr.mxu0 %v590
        %1512 = vmatpush1.msra.mxu0 %v589
        %1513 = vmatprep.subr.mxu0 %v586
        %1514 = vmatpush1.msra.mxu0 %v585
        %1515 = vmatprep.subr.mxu0 %v582
        %1516 = vmatpush1.msra.mxu0 %v581
        %1517 = vmatprep.subr.mxu0 %v578
        %1518 = vmatpush1.msra.mxu0 %v577
        %1519 = vmatprep.subr.mxu0 %v574
        %1520 = vmatpush1.msra.mxu0 %v573
        %1521 = vmatprep.subr.mxu0 %v570
        %1522 = vmatpush1.msra.mxu0 %v569
        %1523 = vmatprep.subr.mxu0 %v566
        %1524 = vmatpush1.msra.mxu0 %v565
        %1525 = vmatprep.subr.mxu0 %v562
        %1526 = vmatpush1.msra.mxu0 %v561
        %1527 = vmatprep.subr.mxu0 %v686
        %1528 = vmatpush2.msra.mxu0 %v685
        %1529 = vmatprep.subr.mxu0 %v682
        %1530 = vmatpush2.msra.mxu0 %v681
        %1531 = vmatprep.subr.mxu0 %v678
        %1532 = vmatpush2.msra.mxu0 %v677
        %1533 = vmatprep.subr.mxu0 %v674
        %1534 = vmatpush2.msra.mxu0 %v673
        %1535 = vmatprep.subr.mxu0 %v670
        %1536 = vmatpush2.msra.mxu0 %v669
        %1537 = vmatprep.subr.mxu0 %v666
        %1538 = vmatpush2.msra.mxu0 %v665
        %1539 = vmatprep.subr.mxu0 %v662
        %1540 = vmatpush2.msra.mxu0 %v661
        %1541 = vmatprep.subr.mxu0 %v658
        %1542 = vmatpush2.msra.mxu0 %v657
        %1543 = vmatprep.subr.mxu0 %v654
        %1544 = vmatpush2.msra.mxu0 %v653
        %1545 = vmatprep.subr.mxu0 %v650
        %1546 = vmatpush2.msra.mxu0 %v649
        %1547 = vmatprep.subr.mxu0 %v646
        %1548 = vmatpush2.msra.mxu0 %v645
        %1549 = vmatprep.subr.mxu0 %v642
        %1550 = vmatpush2.msra.mxu0 %v641
        %1551 = vmatprep.subr.mxu0 %v638
        %1552 = vmatpush2.msra.mxu0 %v637
        %1553 = vmatprep.subr.mxu0 %v634
        %1554 = vmatpush2.msra.mxu0 %v633
        %1555 = vmatprep.subr.mxu0 %v630
        %1556 = vmatpush2.msra.mxu0 %v629
        %1557 = vmatprep.subr.mxu0 %v626
        %1558 = vmatpush2.msra.mxu0 %v625
        %1559 = vmatprep.mubr.f32.mxu0 %v1339
        %1560 = vmatmul.mubr.f32.gmra.mxu0 %v299
        %v1561 = vpop.f32.mrf.mxu0
        %v1562 = vadd.f32 %v1491, %v1561
        %v1563 = vpop.f32.mrf.mxu0
        %v1564 = vadd.f32 %v1493, %v1563
        %1565 = vdwg.mxu0
        %1566 = vmatprep.subr.mxu0 %v750
        %1567 = vmatpush1.msra.mxu0 %v749
        %1568 = vmatprep.subr.mxu0 %v746
        %1569 = vmatpush1.msra.mxu0 %v745
        %1570 = vmatprep.subr.mxu0 %v742
        %1571 = vmatpush1.msra.mxu0 %v741
        %1572 = vmatprep.subr.mxu0 %v738
        %1573 = vmatpush1.msra.mxu0 %v737
        %1574 = vmatprep.subr.mxu0 %v734
        %1575 = vmatpush1.msra.mxu0 %v733
        %1576 = vmatprep.subr.mxu0 %v730
        %1577 = vmatpush1.msra.mxu0 %v729
        %1578 = vmatprep.subr.mxu0 %v726
        %1579 = vmatpush1.msra.mxu0 %v725
        %1580 = vmatprep.subr.mxu0 %v722
        %1581 = vmatpush1.msra.mxu0 %v721
        %1582 = vmatprep.subr.mxu0 %v718
        %1583 = vmatpush1.msra.mxu0 %v717
        %1584 = vmatprep.subr.mxu0 %v714
        %1585 = vmatpush1.msra.mxu0 %v713
        %1586 = vmatprep.subr.mxu0 %v710
        %1587 = vmatpush1.msra.mxu0 %v709
        %1588 = vmatprep.subr.mxu0 %v706
        %1589 = vmatpush1.msra.mxu0 %v705
        %1590 = vmatprep.subr.mxu0 %v702
        %1591 = vmatpush1.msra.mxu0 %v701
        %1592 = vmatprep.subr.mxu0 %v698
        %1593 = vmatpush1.msra.mxu0 %v697
        %1594 = vmatprep.subr.mxu0 %v694
        %1595 = vmatpush1.msra.mxu0 %v693
        %1596 = vmatprep.subr.mxu0 %v690
        %1597 = vmatpush1.msra.mxu0 %v689
        %1598 = vmatprep.subr.mxu0 %v814
        %1599 = vmatpush2.msra.mxu0 %v813
        %1600 = vmatprep.subr.mxu0 %v810
        %1601 = vmatpush2.msra.mxu0 %v809
        %1602 = vmatprep.subr.mxu0 %v806
        %1603 = vmatpush2.msra.mxu0 %v805
        %1604 = vmatprep.subr.mxu0 %v802
        %1605 = vmatpush2.msra.mxu0 %v801
        %1606 = vmatprep.subr.mxu0 %v798
        %1607 = vmatpush2.msra.mxu0 %v797
        %1608 = vmatprep.subr.mxu0 %v794
        %1609 = vmatpush2.msra.mxu0 %v793
        %1610 = vmatprep.subr.mxu0 %v790
        %1611 = vmatpush2.msra.mxu0 %v789
        %1612 = vmatprep.subr.mxu0 %v786
        %1613 = vmatpush2.msra.mxu0 %v785
        %1614 = vmatprep.subr.mxu0 %v782
        %1615 = vmatpush2.msra.mxu0 %v781
        %1616 = vmatprep.subr.mxu0 %v778
        %1617 = vmatpush2.msra.mxu0 %v777
        %1618 = vmatprep.subr.mxu0 %v774
        %1619 = vmatpush2.msra.mxu0 %v773
        %1620 = vmatprep.subr.mxu0 %v770
        %1621 = vmatpush2.msra.mxu0 %v769
        %1622 = vmatprep.subr.mxu0 %v766
        %1623 = vmatpush2.msra.mxu0 %v765
        %1624 = vmatprep.subr.mxu0 %v762
        %1625 = vmatpush2.msra.mxu0 %v761
        %1626 = vmatprep.subr.mxu0 %v758
        %1627 = vmatpush2.msra.mxu0 %v757
        %1628 = vmatprep.subr.mxu0 %v754
        %1629 = vmatpush2.msra.mxu0 %v753
        %1630 = vmatprep.mubr.f32.mxu0 %v1340
        %1631 = vmatmul.mubr.f32.gmra.mxu0 %v300
        %v1632 = vpop.f32.mrf.mxu0
        %v1633 = vadd.f32 %v1562, %v1632
        %v1634 = vpop.f32.mrf.mxu0
        %v1635 = vadd.f32 %v1564, %v1634
        %1636 = vdwg.mxu0
        %1637 = vmatprep.subr.mxu0 %v878
        %1638 = vmatpush1.msra.mxu0 %v877
        %1639 = vmatprep.subr.mxu0 %v874
        %1640 = vmatpush1.msra.mxu0 %v873
        %1641 = vmatprep.subr.mxu0 %v870
        %1642 = vmatpush1.msra.mxu0 %v869
        %1643 = vmatprep.subr.mxu0 %v866
        %1644 = vmatpush1.msra.mxu0 %v865
        %1645 = vmatprep.subr.mxu0 %v862
        %1646 = vmatpush1.msra.mxu0 %v861
        %1647 = vmatprep.subr.mxu0 %v858
        %1648 = vmatpush1.msra.mxu0 %v857
        %1649 = vmatprep.subr.mxu0 %v854
        %1650 = vmatpush1.msra.mxu0 %v853
        %1651 = vmatprep.subr.mxu0 %v850
        %1652 = vmatpush1.msra.mxu0 %v849
        %1653 = vmatprep.subr.mxu0 %v846
        %1654 = vmatpush1.msra.mxu0 %v845
        %1655 = vmatprep.subr.mxu0 %v842
        %1656 = vmatpush1.msra.mxu0 %v841
        %1657 = vmatprep.subr.mxu0 %v838
        %1658 = vmatpush1.msra.mxu0 %v837
        %1659 = vmatprep.subr.mxu0 %v834
        %1660 = vmatpush1.msra.mxu0 %v833
        %1661 = vmatprep.subr.mxu0 %v830
        %1662 = vmatpush1.msra.mxu0 %v829
        %1663 = vmatprep.subr.mxu0 %v826
        %1664 = vmatpush1.msra.mxu0 %v825
        %1665 = vmatprep.subr.mxu0 %v822
        %1666 = vmatpush1.msra.mxu0 %v821
        %1667 = vmatprep.subr.mxu0 %v818
        %1668 = vmatpush1.msra.mxu0 %v817
        %1669 = vmatprep.subr.mxu0 %v942
        %1670 = vmatpush2.msra.mxu0 %v941
        %1671 = vmatprep.subr.mxu0 %v938
        %1672 = vmatpush2.msra.mxu0 %v937
        %1673 = vmatprep.subr.mxu0 %v934
        %1674 = vmatpush2.msra.mxu0 %v933
        %1675 = vmatprep.subr.mxu0 %v930
        %1676 = vmatpush2.msra.mxu0 %v929
        %1677 = vmatprep.subr.mxu0 %v926
        %1678 = vmatpush2.msra.mxu0 %v925
        %1679 = vmatprep.subr.mxu0 %v922
        %1680 = vmatpush2.msra.mxu0 %v921
        %1681 = vmatprep.subr.mxu0 %v918
        %1682 = vmatpush2.msra.mxu0 %v917
        %1683 = vmatprep.subr.mxu0 %v914
        %1684 = vmatpush2.msra.mxu0 %v913
        %1685 = vmatprep.subr.mxu0 %v910
        %1686 = vmatpush2.msra.mxu0 %v909
        %1687 = vmatprep.subr.mxu0 %v906
        %1688 = vmatpush2.msra.mxu0 %v905
        %1689 = vmatprep.subr.mxu0 %v902
        %1690 = vmatpush2.msra.mxu0 %v901
        %1691 = vmatprep.subr.mxu0 %v898
        %1692 = vmatpush2.msra.mxu0 %v897
        %1693 = vmatprep.subr.mxu0 %v894
        %1694 = vmatpush2.msra.mxu0 %v893
        %1695 = vmatprep.subr.mxu0 %v890
        %1696 = vmatpush2.msra.mxu0 %v889
        %1697 = vmatprep.subr.mxu0 %v886
        %1698 = vmatpush2.msra.mxu0 %v885
        %1699 = vmatprep.subr.mxu0 %v882
        %1700 = vmatpush2.msra.mxu0 %v881
        %1701 = vmatprep.mubr.f32.mxu0 %v1341
        %1702 = vmatmul.mubr.f32.gmra.mxu0 %v301
        %v1703 = vpop.f32.mrf.mxu0
        %v1704 = vadd.f32 %v1633, %v1703
        %v1705 = vpop.f32.mrf.mxu0
        %v1706 = vadd.f32 %v1635, %v1705
        %1707 = vdwg.mxu0
        %1708 = vmatprep.subr.mxu0 %v1006
        %1709 = vmatpush1.msra.mxu0 %v1005
        %1710 = vmatprep.subr.mxu0 %v1002
        %1711 = vmatpush1.msra.mxu0 %v1001
        %1712 = vmatprep.subr.mxu0 %v998
        %1713 = vmatpush1.msra.mxu0 %v997
        %1714 = vmatprep.subr.mxu0 %v994
        %1715 = vmatpush1.msra.mxu0 %v993
        %1716 = vmatprep.subr.mxu0 %v990
        %1717 = vmatpush1.msra.mxu0 %v989
        %1718 = vmatprep.subr.mxu0 %v986
        %1719 = vmatpush1.msra.mxu0 %v985
        %1720 = vmatprep.subr.mxu0 %v982
        %1721 = vmatpush1.msra.mxu0 %v981
        %1722 = vmatprep.subr.mxu0 %v978
        %1723 = vmatpush1.msra.mxu0 %v977
        %1724 = vmatprep.subr.mxu0 %v974
        %1725 = vmatpush1.msra.mxu0 %v973
        %1726 = vmatprep.subr.mxu0 %v970
        %1727 = vmatpush1.msra.mxu0 %v969
        %1728 = vmatprep.subr.mxu0 %v966
        %1729 = vmatpush1.msra.mxu0 %v965
        %1730 = vmatprep.subr.mxu0 %v962
        %1731 = vmatpush1.msra.mxu0 %v961
        %1732 = vmatprep.subr.mxu0 %v958
        %1733 = vmatpush1.msra.mxu0 %v957
        %1734 = vmatprep.subr.mxu0 %v954
        %1735 = vmatpush1.msra.mxu0 %v953
        %1736 = vmatprep.subr.mxu0 %v950
        %1737 = vmatpush1.msra.mxu0 %v949
        %1738 = vmatprep.subr.mxu0 %v946
        %1739 = vmatpush1.msra.mxu0 %v945
        %1740 = vmatprep.subr.mxu0 %v1070
        %1741 = vmatpush2.msra.mxu0 %v1069
        %1742 = vmatprep.subr.mxu0 %v1066
        %1743 = vmatpush2.msra.mxu0 %v1065
        %1744 = vmatprep.subr.mxu0 %v1062
        %1745 = vmatpush2.msra.mxu0 %v1061
        %1746 = vmatprep.subr.mxu0 %v1058
        %1747 = vmatpush2.msra.mxu0 %v1057
        %1748 = vmatprep.subr.mxu0 %v1054
        %1749 = vmatpush2.msra.mxu0 %v1053
        %1750 = vmatprep.subr.mxu0 %v1050
        %1751 = vmatpush2.msra.mxu0 %v1049
        %1752 = vmatprep.subr.mxu0 %v1046
        %1753 = vmatpush2.msra.mxu0 %v1045
        %1754 = vmatprep.subr.mxu0 %v1042
        %1755 = vmatpush2.msra.mxu0 %v1041
        %1756 = vmatprep.subr.mxu0 %v1038
        %1757 = vmatpush2.msra.mxu0 %v1037
        %1758 = vmatprep.subr.mxu0 %v1034
        %1759 = vmatpush2.msra.mxu0 %v1033
        %1760 = vmatprep.subr.mxu0 %v1030
        %1761 = vmatpush2.msra.mxu0 %v1029
        %1762 = vmatprep.subr.mxu0 %v1026
        %1763 = vmatpush2.msra.mxu0 %v1025
        %1764 = vmatprep.subr.mxu0 %v1022
        %1765 = vmatpush2.msra.mxu0 %v1021
        %1766 = vmatprep.subr.mxu0 %v1018
        %1767 = vmatpush2.msra.mxu0 %v1017
        %1768 = vmatprep.subr.mxu0 %v1014
        %1769 = vmatpush2.msra.mxu0 %v1013
        %1770 = vmatprep.subr.mxu0 %v1010
        %1771 = vmatpush2.msra.mxu0 %v1009
        %1772 = vmatprep.mubr.f32.mxu0 %v1342
        %1773 = vmatmul.mubr.f32.gmra.mxu0 %v302
        %v1774 = vpop.f32.mrf.mxu0
        %v1775 = vadd.f32 %v1704, %v1774
        %v1776 = vpop.f32.mrf.mxu0
        %v1777 = vadd.f32 %v1706, %v1776
        %1778 = vdwg.mxu0
        %1779 = vmatprep.subr.mxu0 %v1134
        %1780 = vmatpush1.msra.mxu0 %v1133
        %1781 = vmatprep.subr.mxu0 %v1130
        %1782 = vmatpush1.msra.mxu0 %v1129
        %1783 = vmatprep.subr.mxu0 %v1126
        %1784 = vmatpush1.msra.mxu0 %v1125
        %1785 = vmatprep.subr.mxu0 %v1122
        %1786 = vmatpush1.msra.mxu0 %v1121
        %1787 = vmatprep.subr.mxu0 %v1118
        %1788 = vmatpush1.msra.mxu0 %v1117
        %1789 = vmatprep.subr.mxu0 %v1114
        %1790 = vmatpush1.msra.mxu0 %v1113
        %1791 = vmatprep.subr.mxu0 %v1110
        %1792 = vmatpush1.msra.mxu0 %v1109
        %1793 = vmatprep.subr.mxu0 %v1106
        %1794 = vmatpush1.msra.mxu0 %v1105
        %1795 = vmatprep.subr.mxu0 %v1102
        %1796 = vmatpush1.msra.mxu0 %v1101
        %1797 = vmatprep.subr.mxu0 %v1098
        %1798 = vmatpush1.msra.mxu0 %v1097
        %1799 = vmatprep.subr.mxu0 %v1094
        %1800 = vmatpush1.msra.mxu0 %v1093
        %1801 = vmatprep.subr.mxu0 %v1090
        %1802 = vmatpush1.msra.mxu0 %v1089
        %1803 = vmatprep.subr.mxu0 %v1086
        %1804 = vmatpush1.msra.mxu0 %v1085
        %1805 = vmatprep.subr.mxu0 %v1082
        %1806 = vmatpush1.msra.mxu0 %v1081
        %1807 = vmatprep.subr.mxu0 %v1078
        %1808 = vmatpush1.msra.mxu0 %v1077
        %1809 = vmatprep.subr.mxu0 %v1074
        %1810 = vmatpush1.msra.mxu0 %v1073
        %1811 = vmatprep.subr.mxu0 %v1198
        %1812 = vmatpush2.msra.mxu0 %v1197
        %1813 = vmatprep.subr.mxu0 %v1194
        %1814 = vmatpush2.msra.mxu0 %v1193
        %1815 = vmatprep.subr.mxu0 %v1190
        %1816 = vmatpush2.msra.mxu0 %v1189
        %1817 = vmatprep.subr.mxu0 %v1186
        %1818 = vmatpush2.msra.mxu0 %v1185
        %1819 = vmatprep.subr.mxu0 %v1182
        %1820 = vmatpush2.msra.mxu0 %v1181
        %1821 = vmatprep.subr.mxu0 %v1178
        %1822 = vmatpush2.msra.mxu0 %v1177
        %1823 = vmatprep.subr.mxu0 %v1174
        %1824 = vmatpush2.msra.mxu0 %v1173
        %1825 = vmatprep.subr.mxu0 %v1170
        %1826 = vmatpush2.msra.mxu0 %v1169
        %1827 = vmatprep.subr.mxu0 %v1166
        %1828 = vmatpush2.msra.mxu0 %v1165
        %1829 = vmatprep.subr.mxu0 %v1162
        %1830 = vmatpush2.msra.mxu0 %v1161
        %1831 = vmatprep.subr.mxu0 %v1158
        %1832 = vmatpush2.msra.mxu0 %v1157
        %1833 = vmatprep.subr.mxu0 %v1154
        %1834 = vmatpush2.msra.mxu0 %v1153
        %1835 = vmatprep.subr.mxu0 %v1150
        %1836 = vmatpush2.msra.mxu0 %v1149
        %1837 = vmatprep.subr.mxu0 %v1146
        %1838 = vmatpush2.msra.mxu0 %v1145
        %1839 = vmatprep.subr.mxu0 %v1142
        %1840 = vmatpush2.msra.mxu0 %v1141
        %1841 = vmatprep.subr.mxu0 %v1138
        %1842 = vmatpush2.msra.mxu0 %v1137
        %1843 = vmatprep.mubr.f32.mxu0 %v1343
        %1844 = vmatmul.mubr.f32.gmra.mxu0 %v303
        %v1845 = vpop.f32.mrf.mxu0
        %v1846 = vadd.f32 %v1775, %v1845
        %v1847 = vpop.f32.mrf.mxu0
        %v1848 = vadd.f32 %v1777, %v1847
        %1849 = vdwg.mxu0
        %1850 = vmatprep.subr.mxu0 %v1262
        %1851 = vmatpush1.msra.mxu0 %v1261
        %1852 = vmatprep.subr.mxu0 %v1258
        %1853 = vmatpush1.msra.mxu0 %v1257
        %1854 = vmatprep.subr.mxu0 %v1254
        %1855 = vmatpush1.msra.mxu0 %v1253
        %1856 = vmatprep.subr.mxu0 %v1250
        %1857 = vmatpush1.msra.mxu0 %v1249
        %1858 = vmatprep.subr.mxu0 %v1246
        %1859 = vmatpush1.msra.mxu0 %v1245
        %1860 = vmatprep.subr.mxu0 %v1242
        %1861 = vmatpush1.msra.mxu0 %v1241
        %1862 = vmatprep.subr.mxu0 %v1238
        %1863 = vmatpush1.msra.mxu0 %v1237
        %1864 = vmatprep.subr.mxu0 %v1234
        %1865 = vmatpush1.msra.mxu0 %v1233
        %1866 = vmatprep.subr.mxu0 %v1230
        %1867 = vmatpush1.msra.mxu0 %v1229
        %1868 = vmatprep.subr.mxu0 %v1226
        %1869 = vmatpush1.msra.mxu0 %v1225
        %1870 = vmatprep.subr.mxu0 %v1222
        %1871 = vmatpush1.msra.mxu0 %v1221
        %1872 = vmatprep.subr.mxu0 %v1218
        %1873 = vmatpush1.msra.mxu0 %v1217
        %1874 = vmatprep.subr.mxu0 %v1214
        %1875 = vmatpush1.msra.mxu0 %v1213
        %1876 = vmatprep.subr.mxu0 %v1210
        %1877 = vmatpush1.msra.mxu0 %v1209
        %1878 = vmatprep.subr.mxu0 %v1206
        %1879 = vmatpush1.msra.mxu0 %v1205
        %1880 = vmatprep.subr.mxu0 %v1202
        %1881 = vmatpush1.msra.mxu0 %v1201
        %1882 = vmatprep.subr.mxu0 %v1326
        %1883 = vmatpush2.msra.mxu0 %v1325
        %1884 = vmatprep.subr.mxu0 %v1322
        %1885 = vmatpush2.msra.mxu0 %v1321
        %1886 = vmatprep.subr.mxu0 %v1318
        %1887 = vmatpush2.msra.mxu0 %v1317
        %1888 = vmatprep.subr.mxu0 %v1314
        %1889 = vmatpush2.msra.mxu0 %v1313
        %1890 = vmatprep.subr.mxu0 %v1310
        %1891 = vmatpush2.msra.mxu0 %v1309
        %1892 = vmatprep.subr.mxu0 %v1306
        %1893 = vmatpush2.msra.mxu0 %v1305
        %1894 = vmatprep.subr.mxu0 %v1302
        %1895 = vmatpush2.msra.mxu0 %v1301
        %1896 = vmatprep.subr.mxu0 %v1298
        %1897 = vmatpush2.msra.mxu0 %v1297
        %1898 = vmatprep.subr.mxu0 %v1294
        %1899 = vmatpush2.msra.mxu0 %v1293
        %1900 = vmatprep.subr.mxu0 %v1290
        %1901 = vmatpush2.msra.mxu0 %v1289
        %1902 = vmatprep.subr.mxu0 %v1286
        %1903 = vmatpush2.msra.mxu0 %v1285
        %1904 = vmatprep.subr.mxu0 %v1282
        %1905 = vmatpush2.msra.mxu0 %v1281
        %1906 = vmatprep.subr.mxu0 %v1278
        %1907 = vmatpush2.msra.mxu0 %v1277
        %1908 = vmatprep.subr.mxu0 %v1274
        %1909 = vmatpush2.msra.mxu0 %v1273
        %1910 = vmatprep.subr.mxu0 %v1270
        %1911 = vmatpush2.msra.mxu0 %v1269
        %1912 = vmatprep.subr.mxu0 %v1266
        %1913 = vmatpush2.msra.mxu0 %v1265
        %1914 = vmatprep.mubr.f32.mxu0 %v1344
        %1915 = vmatmul.mubr.f32.gmra.mxu0 %v304
        %v1916 = vpop.f32.mrf.mxu0
        %v1917 = vadd.f32 %v1846, %v1916
        %v1918 = vpop.f32.mrf.mxu0
        %v1919 = vadd.f32 %v1848, %v1918
        %1920 = vdwg.mxu0
        %1921 = vmatprep.subr.mxu0 %v368
        %1922 = vmatpush1.msra.mxu0 %v367
        %1923 = vmatprep.subr.mxu0 %v364
        %1924 = vmatpush1.msra.mxu0 %v363
        %1925 = vmatprep.subr.mxu0 %v360
        %1926 = vmatpush1.msra.mxu0 %v359
        %1927 = vmatprep.subr.mxu0 %v356
        %1928 = vmatpush1.msra.mxu0 %v355
        %1929 = vmatprep.subr.mxu0 %v352
        %1930 = vmatpush1.msra.mxu0 %v351
        %1931 = vmatprep.subr.mxu0 %v348
        %1932 = vmatpush1.msra.mxu0 %v347
        %1933 = vmatprep.subr.mxu0 %v344
        %1934 = vmatpush1.msra.mxu0 %v343
        %1935 = vmatprep.subr.mxu0 %v340
        %1936 = vmatpush1.msra.mxu0 %v339
        %1937 = vmatprep.subr.mxu0 %v336
        %1938 = vmatpush1.msra.mxu0 %v335
        %1939 = vmatprep.subr.mxu0 %v332
        %1940 = vmatpush1.msra.mxu0 %v331
        %1941 = vmatprep.subr.mxu0 %v328
        %1942 = vmatpush1.msra.mxu0 %v327
        %1943 = vmatprep.subr.mxu0 %v324
        %1944 = vmatpush1.msra.mxu0 %v323
        %1945 = vmatprep.subr.mxu0 %v320
        %1946 = vmatpush1.msra.mxu0 %v319
        %1947 = vmatprep.subr.mxu0 %v316
        %1948 = vmatpush1.msra.mxu0 %v315
        %1949 = vmatprep.subr.mxu0 %v312
        %1950 = vmatpush1.msra.mxu0 %v311
        %1951 = vmatprep.subr.mxu0 %v308
        %1952 = vmatpush1.msra.mxu0 %v307
        %1953 = vmatprep.subr.mxu0 %v432
        %1954 = vmatpush2.msra.mxu0 %v431
        %1955 = vmatprep.subr.mxu0 %v428
        %1956 = vmatpush2.msra.mxu0 %v427
        %1957 = vmatprep.subr.mxu0 %v424
        %1958 = vmatpush2.msra.mxu0 %v423
        %1959 = vmatprep.subr.mxu0 %v420
        %1960 = vmatpush2.msra.mxu0 %v419
        %1961 = vmatprep.subr.mxu0 %v416
        %1962 = vmatpush2.msra.mxu0 %v415
        %1963 = vmatprep.subr.mxu0 %v412
        %1964 = vmatpush2.msra.mxu0 %v411
        %1965 = vmatprep.subr.mxu0 %v408
        %1966 = vmatpush2.msra.mxu0 %v407
        %1967 = vmatprep.subr.mxu0 %v404
        %1968 = vmatpush2.msra.mxu0 %v403
        %1969 = vmatprep.subr.mxu0 %v400
        %1970 = vmatpush2.msra.mxu0 %v399
        %1971 = vmatprep.subr.mxu0 %v396
        %1972 = vmatpush2.msra.mxu0 %v395
        %1973 = vmatprep.subr.mxu0 %v392
        %1974 = vmatpush2.msra.mxu0 %v391
        %1975 = vmatprep.subr.mxu0 %v388
        %1976 = vmatpush2.msra.mxu0 %v387
        %1977 = vmatprep.subr.mxu0 %v384
        %1978 = vmatpush2.msra.mxu0 %v383
        %1979 = vmatprep.subr.mxu0 %v380
        %1980 = vmatpush2.msra.mxu0 %v379
        %1981 = vmatprep.subr.mxu0 %v376
        %1982 = vmatpush2.msra.mxu0 %v375
        %1983 = vmatprep.subr.mxu0 %v372
        %1984 = vmatpush2.msra.mxu0 %v371
        %1985 = vmatprep.mubr.f32.mxu0 %v1337
        %1986 = vmatmul.mubr.f32.gmra.mxu0 %v297
        %v1987 = vpop.f32.mrf.mxu0
        %v1988 = vadd.f32 0.0, %v1987
        %v1989 = vpop.f32.mrf.mxu0
        %v1990 = vadd.f32 0.0, %v1989
        %1991 = vdwg.mxu0
        %1992 = vmatprep.subr.mxu0 %v496
        %1993 = vmatpush1.msra.mxu0 %v495
        %1994 = vmatprep.subr.mxu0 %v492
        %1995 = vmatpush1.msra.mxu0 %v491
        %1996 = vmatprep.subr.mxu0 %v488
        %1997 = vmatpush1.msra.mxu0 %v487
        %1998 = vmatprep.subr.mxu0 %v484
        %1999 = vmatpush1.msra.mxu0 %v483
        %2000 = vmatprep.subr.mxu0 %v480
        %2001 = vmatpush1.msra.mxu0 %v479
        %2002 = vmatprep.subr.mxu0 %v476
        %2003 = vmatpush1.msra.mxu0 %v475
        %2004 = vmatprep.subr.mxu0 %v472
        %2005 = vmatpush1.msra.mxu0 %v471
        %2006 = vmatprep.subr.mxu0 %v468
        %2007 = vmatpush1.msra.mxu0 %v467
        %2008 = vmatprep.subr.mxu0 %v464
        %2009 = vmatpush1.msra.mxu0 %v463
        %2010 = vmatprep.subr.mxu0 %v460
        %2011 = vmatpush1.msra.mxu0 %v459
        %2012 = vmatprep.subr.mxu0 %v456
        %2013 = vmatpush1.msra.mxu0 %v455
        %2014 = vmatprep.subr.mxu0 %v452
        %2015 = vmatpush1.msra.mxu0 %v451
        %2016 = vmatprep.subr.mxu0 %v448
        %2017 = vmatpush1.msra.mxu0 %v447
        %2018 = vmatprep.subr.mxu0 %v444
        %2019 = vmatpush1.msra.mxu0 %v443
        %2020 = vmatprep.subr.mxu0 %v440
        %2021 = vmatpush1.msra.mxu0 %v439
        %2022 = vmatprep.subr.mxu0 %v436
        %2023 = vmatpush1.msra.mxu0 %v435
        %2024 = vmatprep.subr.mxu0 %v560
        %2025 = vmatpush2.msra.mxu0 %v559
        %2026 = vmatprep.subr.mxu0 %v556
        %2027 = vmatpush2.msra.mxu0 %v555
        %2028 = vmatprep.subr.mxu0 %v552
        %2029 = vmatpush2.msra.mxu0 %v551
        %2030 = vmatprep.subr.mxu0 %v548
        %2031 = vmatpush2.msra.mxu0 %v547
        %2032 = vmatprep.subr.mxu0 %v544
        %2033 = vmatpush2.msra.mxu0 %v543
        %2034 = vmatprep.subr.mxu0 %v540
        %2035 = vmatpush2.msra.mxu0 %v539
        %2036 = vmatprep.subr.mxu0 %v536
        %2037 = vmatpush2.msra.mxu0 %v535
        %2038 = vmatprep.subr.mxu0 %v532
        %2039 = vmatpush2.msra.mxu0 %v531
        %2040 = vmatprep.subr.mxu0 %v528
        %2041 = vmatpush2.msra.mxu0 %v527
        %2042 = vmatprep.subr.mxu0 %v524
        %2043 = vmatpush2.msra.mxu0 %v523
        %2044 = vmatprep.subr.mxu0 %v520
        %2045 = vmatpush2.msra.mxu0 %v519
        %2046 = vmatprep.subr.mxu0 %v516
        %2047 = vmatpush2.msra.mxu0 %v515
        %2048 = vmatprep.subr.mxu0 %v512
        %2049 = vmatpush2.msra.mxu0 %v511
        %2050 = vmatprep.subr.mxu0 %v508
        %2051 = vmatpush2.msra.mxu0 %v507
        %2052 = vmatprep.subr.mxu0 %v504
        %2053 = vmatpush2.msra.mxu0 %v503
        %2054 = vmatprep.subr.mxu0 %v500
        %2055 = vmatpush2.msra.mxu0 %v499
        %2056 = vmatprep.mubr.f32.mxu0 %v1338
        %2057 = vmatmul.mubr.f32.gmra.mxu0 %v298
        %v2058 = vpop.f32.mrf.mxu0
        %v2059 = vadd.f32 %v1988, %v2058
        %v2060 = vpop.f32.mrf.mxu0
        %v2061 = vadd.f32 %v1990, %v2060
        %2062 = vdwg.mxu0
        %2063 = vmatprep.subr.mxu0 %v624
        %2064 = vmatpush1.msra.mxu0 %v623
        %2065 = vmatprep.subr.mxu0 %v620
        %2066 = vmatpush1.msra.mxu0 %v619
        %2067 = vmatprep.subr.mxu0 %v616
        %2068 = vmatpush1.msra.mxu0 %v615
        %2069 = vmatprep.subr.mxu0 %v612
        %2070 = vmatpush1.msra.mxu0 %v611
        %2071 = vmatprep.subr.mxu0 %v608
        %2072 = vmatpush1.msra.mxu0 %v607
        %2073 = vmatprep.subr.mxu0 %v604
        %2074 = vmatpush1.msra.mxu0 %v603
        %2075 = vmatprep.subr.mxu0 %v600
        %2076 = vmatpush1.msra.mxu0 %v599
        %2077 = vmatprep.subr.mxu0 %v596
        %2078 = vmatpush1.msra.mxu0 %v595
        %2079 = vmatprep.subr.mxu0 %v592
        %2080 = vmatpush1.msra.mxu0 %v591
        %2081 = vmatprep.subr.mxu0 %v588
        %2082 = vmatpush1.msra.mxu0 %v587
        %2083 = vmatprep.subr.mxu0 %v584
        %2084 = vmatpush1.msra.mxu0 %v583
        %2085 = vmatprep.subr.mxu0 %v580
        %2086 = vmatpush1.msra.mxu0 %v579
        %2087 = vmatprep.subr.mxu0 %v576
        %2088 = vmatpush1.msra.mxu0 %v575
        %2089 = vmatprep.subr.mxu0 %v572
        %2090 = vmatpush1.msra.mxu0 %v571
        %2091 = vmatprep.subr.mxu0 %v568
        %2092 = vmatpush1.msra.mxu0 %v567
        %2093 = vmatprep.subr.mxu0 %v564
        %2094 = vmatpush1.msra.mxu0 %v563
        %2095 = vmatprep.subr.mxu0 %v688
        %2096 = vmatpush2.msra.mxu0 %v687
        %2097 = vmatprep.subr.mxu0 %v684
        %2098 = vmatpush2.msra.mxu0 %v683
        %2099 = vmatprep.subr.mxu0 %v680
        %2100 = vmatpush2.msra.mxu0 %v679
        %2101 = vmatprep.subr.mxu0 %v676
        %2102 = vmatpush2.msra.mxu0 %v675
        %2103 = vmatprep.subr.mxu0 %v672
        %2104 = vmatpush2.msra.mxu0 %v671
        %2105 = vmatprep.subr.mxu0 %v668
        %2106 = vmatpush2.msra.mxu0 %v667
        %2107 = vmatprep.subr.mxu0 %v664
        %2108 = vmatpush2.msra.mxu0 %v663
        %2109 = vmatprep.subr.mxu0 %v660
        %2110 = vmatpush2.msra.mxu0 %v659
        %2111 = vmatprep.subr.mxu0 %v656
        %2112 = vmatpush2.msra.mxu0 %v655
        %2113 = vmatprep.subr.mxu0 %v652
        %2114 = vmatpush2.msra.mxu0 %v651
        %2115 = vmatprep.subr.mxu0 %v648
        %2116 = vmatpush2.msra.mxu0 %v647
        %2117 = vmatprep.subr.mxu0 %v644
        %2118 = vmatpush2.msra.mxu0 %v643
        %2119 = vmatprep.subr.mxu0 %v640
        %2120 = vmatpush2.msra.mxu0 %v639
        %2121 = vmatprep.subr.mxu0 %v636
        %2122 = vmatpush2.msra.mxu0 %v635
        %2123 = vmatprep.subr.mxu0 %v632
        %2124 = vmatpush2.msra.mxu0 %v631
        %2125 = vmatprep.subr.mxu0 %v628
        %2126 = vmatpush2.msra.mxu0 %v627
        %2127 = vmatprep.mubr.f32.mxu0 %v1339
        %2128 = vmatmul.mubr.f32.gmra.mxu0 %v299
        %v2129 = vpop.f32.mrf.mxu0
        %v2130 = vadd.f32 %v2059, %v2129
        %v2131 = vpop.f32.mrf.mxu0
        %v2132 = vadd.f32 %v2061, %v2131
        %2133 = vdwg.mxu0
        %2134 = vmatprep.subr.mxu0 %v752
        %2135 = vmatpush1.msra.mxu0 %v751
        %2136 = vmatprep.subr.mxu0 %v748
        %2137 = vmatpush1.msra.mxu0 %v747
        %2138 = vmatprep.subr.mxu0 %v744
        %2139 = vmatpush1.msra.mxu0 %v743
        %2140 = vmatprep.subr.mxu0 %v740
        %2141 = vmatpush1.msra.mxu0 %v739
        %2142 = vmatprep.subr.mxu0 %v736
        %2143 = vmatpush1.msra.mxu0 %v735
        %2144 = vmatprep.subr.mxu0 %v732
        %2145 = vmatpush1.msra.mxu0 %v731
        %2146 = vmatprep.subr.mxu0 %v728
        %2147 = vmatpush1.msra.mxu0 %v727
        %2148 = vmatprep.subr.mxu0 %v724
        %2149 = vmatpush1.msra.mxu0 %v723
        %2150 = vmatprep.subr.mxu0 %v720
        %2151 = vmatpush1.msra.mxu0 %v719
        %2152 = vmatprep.subr.mxu0 %v716
        %2153 = vmatpush1.msra.mxu0 %v715
        %2154 = vmatprep.subr.mxu0 %v712
        %2155 = vmatpush1.msra.mxu0 %v711
        %2156 = vmatprep.subr.mxu0 %v708
        %2157 = vmatpush1.msra.mxu0 %v707
        %2158 = vmatprep.subr.mxu0 %v704
        %2159 = vmatpush1.msra.mxu0 %v703
        %2160 = vmatprep.subr.mxu0 %v700
        %2161 = vmatpush1.msra.mxu0 %v699
        %2162 = vmatprep.subr.mxu0 %v696
        %2163 = vmatpush1.msra.mxu0 %v695
        %2164 = vmatprep.subr.mxu0 %v692
        %2165 = vmatpush1.msra.mxu0 %v691
        %2166 = vmatprep.subr.mxu0 %v816
        %2167 = vmatpush2.msra.mxu0 %v815
        %2168 = vmatprep.subr.mxu0 %v812
        %2169 = vmatpush2.msra.mxu0 %v811
        %2170 = vmatprep.subr.mxu0 %v808
        %2171 = vmatpush2.msra.mxu0 %v807
        %2172 = vmatprep.subr.mxu0 %v804
        %2173 = vmatpush2.msra.mxu0 %v803
        %2174 = vmatprep.subr.mxu0 %v800
        %2175 = vmatpush2.msra.mxu0 %v799
        %2176 = vmatprep.subr.mxu0 %v796
        %2177 = vmatpush2.msra.mxu0 %v795
        %2178 = vmatprep.subr.mxu0 %v792
        %2179 = vmatpush2.msra.mxu0 %v791
        %2180 = vmatprep.subr.mxu0 %v788
        %2181 = vmatpush2.msra.mxu0 %v787
        %2182 = vmatprep.subr.mxu0 %v784
        %2183 = vmatpush2.msra.mxu0 %v783
        %2184 = vmatprep.subr.mxu0 %v780
        %2185 = vmatpush2.msra.mxu0 %v779
        %2186 = vmatprep.subr.mxu0 %v776
        %2187 = vmatpush2.msra.mxu0 %v775
        %2188 = vmatprep.subr.mxu0 %v772
        %2189 = vmatpush2.msra.mxu0 %v771
        %2190 = vmatprep.subr.mxu0 %v768
        %2191 = vmatpush2.msra.mxu0 %v767
        %2192 = vmatprep.subr.mxu0 %v764
        %2193 = vmatpush2.msra.mxu0 %v763
        %2194 = vmatprep.subr.mxu0 %v760
        %2195 = vmatpush2.msra.mxu0 %v759
        %2196 = vmatprep.subr.mxu0 %v756
        %2197 = vmatpush2.msra.mxu0 %v755
        %2198 = vmatprep.mubr.f32.mxu0 %v1340
        %2199 = vmatmul.mubr.f32.gmra.mxu0 %v300
        %v2200 = vpop.f32.mrf.mxu0
        %v2201 = vadd.f32 %v2130, %v2200
        %v2202 = vpop.f32.mrf.mxu0
        %v2203 = vadd.f32 %v2132, %v2202
        %2204 = vdwg.mxu0
        %2205 = vmatprep.subr.mxu0 %v880
        %2206 = vmatpush1.msra.mxu0 %v879
        %2207 = vmatprep.subr.mxu0 %v876
        %2208 = vmatpush1.msra.mxu0 %v875
        %2209 = vmatprep.subr.mxu0 %v872
        %2210 = vmatpush1.msra.mxu0 %v871
        %2211 = vmatprep.subr.mxu0 %v868
        %2212 = vmatpush1.msra.mxu0 %v867
        %2213 = vmatprep.subr.mxu0 %v864
        %2214 = vmatpush1.msra.mxu0 %v863
        %2215 = vmatprep.subr.mxu0 %v860
        %2216 = vmatpush1.msra.mxu0 %v859
        %2217 = vmatprep.subr.mxu0 %v856
        %2218 = vmatpush1.msra.mxu0 %v855
        %2219 = vmatprep.subr.mxu0 %v852
        %2220 = vmatpush1.msra.mxu0 %v851
        %2221 = vmatprep.subr.mxu0 %v848
        %2222 = vmatpush1.msra.mxu0 %v847
        %2223 = vmatprep.subr.mxu0 %v844
        %2224 = vmatpush1.msra.mxu0 %v843
        %2225 = vmatprep.subr.mxu0 %v840
        %2226 = vmatpush1.msra.mxu0 %v839
        %2227 = vmatprep.subr.mxu0 %v836
        %2228 = vmatpush1.msra.mxu0 %v835
        %2229 = vmatprep.subr.mxu0 %v832
        %2230 = vmatpush1.msra.mxu0 %v831
        %2231 = vmatprep.subr.mxu0 %v828
        %2232 = vmatpush1.msra.mxu0 %v827
        %2233 = vmatprep.subr.mxu0 %v824
        %2234 = vmatpush1.msra.mxu0 %v823
        %2235 = vmatprep.subr.mxu0 %v820
        %2236 = vmatpush1.msra.mxu0 %v819
        %2237 = vmatprep.subr.mxu0 %v944
        %2238 = vmatpush2.msra.mxu0 %v943
        %2239 = vmatprep.subr.mxu0 %v940
        %2240 = vmatpush2.msra.mxu0 %v939
        %2241 = vmatprep.subr.mxu0 %v936
        %2242 = vmatpush2.msra.mxu0 %v935
        %2243 = vmatprep.subr.mxu0 %v932
        %2244 = vmatpush2.msra.mxu0 %v931
        %2245 = vmatprep.subr.mxu0 %v928
        %2246 = vmatpush2.msra.mxu0 %v927
        %2247 = vmatprep.subr.mxu0 %v924
        %2248 = vmatpush2.msra.mxu0 %v923
        %2249 = vmatprep.subr.mxu0 %v920
        %2250 = vmatpush2.msra.mxu0 %v919
        %2251 = vmatprep.subr.mxu0 %v916
        %2252 = vmatpush2.msra.mxu0 %v915
        %2253 = vmatprep.subr.mxu0 %v912
        %2254 = vmatpush2.msra.mxu0 %v911
        %2255 = vmatprep.subr.mxu0 %v908
        %2256 = vmatpush2.msra.mxu0 %v907
        %2257 = vmatprep.subr.mxu0 %v904
        %2258 = vmatpush2.msra.mxu0 %v903
        %2259 = vmatprep.subr.mxu0 %v900
        %2260 = vmatpush2.msra.mxu0 %v899
        %2261 = vmatprep.subr.mxu0 %v896
        %2262 = vmatpush2.msra.mxu0 %v895
        %2263 = vmatprep.subr.mxu0 %v892
        %2264 = vmatpush2.msra.mxu0 %v891
        %2265 = vmatprep.subr.mxu0 %v888
        %2266 = vmatpush2.msra.mxu0 %v887
        %2267 = vmatprep.subr.mxu0 %v884
        %2268 = vmatpush2.msra.mxu0 %v883
        %2269 = vmatprep.mubr.f32.mxu0 %v1341
        %2270 = vmatmul.mubr.f32.gmra.mxu0 %v301
        %v2271 = vpop.f32.mrf.mxu0
        %v2272 = vadd.f32 %v2201, %v2271
        %v2273 = vpop.f32.mrf.mxu0
        %v2274 = vadd.f32 %v2203, %v2273
        %2275 = vdwg.mxu0
        %2276 = vmatprep.subr.mxu0 %v1008
        %2277 = vmatpush1.msra.mxu0 %v1007
        %2278 = vmatprep.subr.mxu0 %v1004
        %2279 = vmatpush1.msra.mxu0 %v1003
        %2280 = vmatprep.subr.mxu0 %v1000
        %2281 = vmatpush1.msra.mxu0 %v999
        %2282 = vmatprep.subr.mxu0 %v996
        %2283 = vmatpush1.msra.mxu0 %v995
        %2284 = vmatprep.subr.mxu0 %v992
        %2285 = vmatpush1.msra.mxu0 %v991
        %2286 = vmatprep.subr.mxu0 %v988
        %2287 = vmatpush1.msra.mxu0 %v987
        %2288 = vmatprep.subr.mxu0 %v984
        %2289 = vmatpush1.msra.mxu0 %v983
        %2290 = vmatprep.subr.mxu0 %v980
        %2291 = vmatpush1.msra.mxu0 %v979
        %2292 = vmatprep.subr.mxu0 %v976
        %2293 = vmatpush1.msra.mxu0 %v975
        %2294 = vmatprep.subr.mxu0 %v972
        %2295 = vmatpush1.msra.mxu0 %v971
        %2296 = vmatprep.subr.mxu0 %v968
        %2297 = vmatpush1.msra.mxu0 %v967
        %2298 = vmatprep.subr.mxu0 %v964
        %2299 = vmatpush1.msra.mxu0 %v963
        %2300 = vmatprep.subr.mxu0 %v960
        %2301 = vmatpush1.msra.mxu0 %v959
        %2302 = vmatprep.subr.mxu0 %v956
        %2303 = vmatpush1.msra.mxu0 %v955
        %2304 = vmatprep.subr.mxu0 %v952
        %2305 = vmatpush1.msra.mxu0 %v951
        %2306 = vmatprep.subr.mxu0 %v948
        %2307 = vmatpush1.msra.mxu0 %v947
        %2308 = vmatprep.subr.mxu0 %v1072
        %2309 = vmatpush2.msra.mxu0 %v1071
        %2310 = vmatprep.subr.mxu0 %v1068
        %2311 = vmatpush2.msra.mxu0 %v1067
        %2312 = vmatprep.subr.mxu0 %v1064
        %2313 = vmatpush2.msra.mxu0 %v1063
        %2314 = vmatprep.subr.mxu0 %v1060
        %2315 = vmatpush2.msra.mxu0 %v1059
        %2316 = vmatprep.subr.mxu0 %v1056
        %2317 = vmatpush2.msra.mxu0 %v1055
        %2318 = vmatprep.subr.mxu0 %v1052
        %2319 = vmatpush2.msra.mxu0 %v1051
        %2320 = vmatprep.subr.mxu0 %v1048
        %2321 = vmatpush2.msra.mxu0 %v1047
        %2322 = vmatprep.subr.mxu0 %v1044
        %2323 = vmatpush2.msra.mxu0 %v1043
        %2324 = vmatprep.subr.mxu0 %v1040
        %2325 = vmatpush2.msra.mxu0 %v1039
        %2326 = vmatprep.subr.mxu0 %v1036
        %2327 = vmatpush2.msra.mxu0 %v1035
        %2328 = vmatprep.subr.mxu0 %v1032
        %2329 = vmatpush2.msra.mxu0 %v1031
        %2330 = vmatprep.subr.mxu0 %v1028
        %2331 = vmatpush2.msra.mxu0 %v1027
        %2332 = vmatprep.subr.mxu0 %v1024
        %2333 = vmatpush2.msra.mxu0 %v1023
        %2334 = vmatprep.subr.mxu0 %v1020
        %2335 = vmatpush2.msra.mxu0 %v1019
        %2336 = vmatprep.subr.mxu0 %v1016
        %2337 = vmatpush2.msra.mxu0 %v1015
        %2338 = vmatprep.subr.mxu0 %v1012
        %2339 = vmatpush2.msra.mxu0 %v1011
        %2340 = vmatprep.mubr.f32.mxu0 %v1342
        %2341 = vmatmul.mubr.f32.gmra.mxu0 %v302
        %v2342 = vpop.f32.mrf.mxu0
        %v2343 = vadd.f32 %v2272, %v2342
        %v2344 = vpop.f32.mrf.mxu0
        %v2345 = vadd.f32 %v2274, %v2344
        %2346 = vdwg.mxu0
        %2347 = vmatprep.subr.mxu0 %v1136
        %2348 = vmatpush1.msra.mxu0 %v1135
        %2349 = vmatprep.subr.mxu0 %v1132
        %2350 = vmatpush1.msra.mxu0 %v1131
        %2351 = vmatprep.subr.mxu0 %v1128
        %2352 = vmatpush1.msra.mxu0 %v1127
        %2353 = vmatprep.subr.mxu0 %v1124
        %2354 = vmatpush1.msra.mxu0 %v1123
        %2355 = vmatprep.subr.mxu0 %v1120
        %2356 = vmatpush1.msra.mxu0 %v1119
        %2357 = vmatprep.subr.mxu0 %v1116
        %2358 = vmatpush1.msra.mxu0 %v1115
        %2359 = vmatprep.subr.mxu0 %v1112
        %2360 = vmatpush1.msra.mxu0 %v1111
        %2361 = vmatprep.subr.mxu0 %v1108
        %2362 = vmatpush1.msra.mxu0 %v1107
        %2363 = vmatprep.subr.mxu0 %v1104
        %2364 = vmatpush1.msra.mxu0 %v1103
        %2365 = vmatprep.subr.mxu0 %v1100
        %2366 = vmatpush1.msra.mxu0 %v1099
        %2367 = vmatprep.subr.mxu0 %v1096
        %2368 = vmatpush1.msra.mxu0 %v1095
        %2369 = vmatprep.subr.mxu0 %v1092
        %2370 = vmatpush1.msra.mxu0 %v1091
        %2371 = vmatprep.subr.mxu0 %v1088
        %2372 = vmatpush1.msra.mxu0 %v1087
        %2373 = vmatprep.subr.mxu0 %v1084
        %2374 = vmatpush1.msra.mxu0 %v1083
        %2375 = vmatprep.subr.mxu0 %v1080
        %2376 = vmatpush1.msra.mxu0 %v1079
        %2377 = vmatprep.subr.mxu0 %v1076
        %2378 = vmatpush1.msra.mxu0 %v1075
        %2379 = vmatprep.subr.mxu0 %v1200
        %2380 = vmatpush2.msra.mxu0 %v1199
        %2381 = vmatprep.subr.mxu0 %v1196
        %2382 = vmatpush2.msra.mxu0 %v1195
        %2383 = vmatprep.subr.mxu0 %v1192
        %2384 = vmatpush2.msra.mxu0 %v1191
        %2385 = vmatprep.subr.mxu0 %v1188
        %2386 = vmatpush2.msra.mxu0 %v1187
        %2387 = vmatprep.subr.mxu0 %v1184
        %2388 = vmatpush2.msra.mxu0 %v1183
        %2389 = vmatprep.subr.mxu0 %v1180
        %2390 = vmatpush2.msra.mxu0 %v1179
        %2391 = vmatprep.subr.mxu0 %v1176
        %2392 = vmatpush2.msra.mxu0 %v1175
        %2393 = vmatprep.subr.mxu0 %v1172
        %2394 = vmatpush2.msra.mxu0 %v1171
        %2395 = vmatprep.subr.mxu0 %v1168
        %2396 = vmatpush2.msra.mxu0 %v1167
        %2397 = vmatprep.subr.mxu0 %v1164
        %2398 = vmatpush2.msra.mxu0 %v1163
        %2399 = vmatprep.subr.mxu0 %v1160
        %2400 = vmatpush2.msra.mxu0 %v1159
        %2401 = vmatprep.subr.mxu0 %v1156
        %2402 = vmatpush2.msra.mxu0 %v1155
        %2403 = vmatprep.subr.mxu0 %v1152
        %2404 = vmatpush2.msra.mxu0 %v1151
        %2405 = vmatprep.subr.mxu0 %v1148
        %2406 = vmatpush2.msra.mxu0 %v1147
        %2407 = vmatprep.subr.mxu0 %v1144
        %2408 = vmatpush2.msra.mxu0 %v1143
        %2409 = vmatprep.subr.mxu0 %v1140
        %2410 = vmatpush2.msra.mxu0 %v1139
        %2411 = vmatprep.mubr.f32.mxu0 %v1343
        %2412 = vmatmul.mubr.f32.gmra.mxu0 %v303
        %v2413 = vpop.f32.mrf.mxu0
        %v2414 = vadd.f32 %v2343, %v2413
        %v2415 = vpop.f32.mrf.mxu0
        %v2416 = vadd.f32 %v2345, %v2415
        %2417 = vdwg.mxu0
        %2418 = vmatprep.subr.mxu0 %v1264
        %2419 = vmatpush1.msra.mxu0 %v1263
        %2420 = vmatprep.subr.mxu0 %v1260
        %2421 = vmatpush1.msra.mxu0 %v1259
        %2422 = vmatprep.subr.mxu0 %v1256
        %2423 = vmatpush1.msra.mxu0 %v1255
        %2424 = vmatprep.subr.mxu0 %v1252
        %2425 = vmatpush1.msra.mxu0 %v1251
        %2426 = vmatprep.subr.mxu0 %v1248
        %2427 = vmatpush1.msra.mxu0 %v1247
        %2428 = vmatprep.subr.mxu0 %v1244
        %2429 = vmatpush1.msra.mxu0 %v1243
        %2430 = vmatprep.subr.mxu0 %v1240
        %2431 = vmatpush1.msra.mxu0 %v1239
        %2432 = vmatprep.subr.mxu0 %v1236
        %2433 = vmatpush1.msra.mxu0 %v1235
        %2434 = vmatprep.subr.mxu0 %v1232
        %2435 = vmatpush1.msra.mxu0 %v1231
        %2436 = vmatprep.subr.mxu0 %v1228
        %2437 = vmatpush1.msra.mxu0 %v1227
        %2438 = vmatprep.subr.mxu0 %v1224
        %2439 = vmatpush1.msra.mxu0 %v1223
        %2440 = vmatprep.subr.mxu0 %v1220
        %2441 = vmatpush1.msra.mxu0 %v1219
        %2442 = vmatprep.subr.mxu0 %v1216
        %2443 = vmatpush1.msra.mxu0 %v1215
        %2444 = vmatprep.subr.mxu0 %v1212
        %2445 = vmatpush1.msra.mxu0 %v1211
        %2446 = vmatprep.subr.mxu0 %v1208
        %2447 = vmatpush1.msra.mxu0 %v1207
        %2448 = vmatprep.subr.mxu0 %v1204
        %2449 = vmatpush1.msra.mxu0 %v1203
        %2450 = vmatprep.subr.mxu0 %v1328
        %2451 = vmatpush2.msra.mxu0 %v1327
        %2452 = vmatprep.subr.mxu0 %v1324
        %2453 = vmatpush2.msra.mxu0 %v1323
        %2454 = vmatprep.subr.mxu0 %v1320
        %2455 = vmatpush2.msra.mxu0 %v1319
        %2456 = vmatprep.subr.mxu0 %v1316
        %2457 = vmatpush2.msra.mxu0 %v1315
        %2458 = vmatprep.subr.mxu0 %v1312
        %2459 = vmatpush2.msra.mxu0 %v1311
        %2460 = vmatprep.subr.mxu0 %v1308
        %2461 = vmatpush2.msra.mxu0 %v1307
        %2462 = vmatprep.subr.mxu0 %v1304
        %2463 = vmatpush2.msra.mxu0 %v1303
        %2464 = vmatprep.subr.mxu0 %v1300
        %2465 = vmatpush2.msra.mxu0 %v1299
        %2466 = vmatprep.subr.mxu0 %v1296
        %2467 = vmatpush2.msra.mxu0 %v1295
        %2468 = vmatprep.subr.mxu0 %v1292
        %2469 = vmatpush2.msra.mxu0 %v1291
        %2470 = vmatprep.subr.mxu0 %v1288
        %2471 = vmatpush2.msra.mxu0 %v1287
        %2472 = vmatprep.subr.mxu0 %v1284
        %2473 = vmatpush2.msra.mxu0 %v1283
        %2474 = vmatprep.subr.mxu0 %v1280
        %2475 = vmatpush2.msra.mxu0 %v1279
        %2476 = vmatprep.subr.mxu0 %v1276
        %2477 = vmatpush2.msra.mxu0 %v1275
        %2478 = vmatprep.subr.mxu0 %v1272
        %2479 = vmatpush2.msra.mxu0 %v1271
        %2480 = vmatprep.subr.mxu0 %v1268
        %2481 = vmatpush2.msra.mxu0 %v1267
        %2482 = vmatprep.mubr.f32.mxu0 %v1344
        %2483 = vmatmul.mubr.f32.gmra.mxu0 %v304
        %v2484 = vpop.f32.mrf.mxu0
        %v2485 = vadd.f32 %v2414, %v2484
        %v2486 = vpop.f32.mrf.mxu0
        %v2487 = vadd.f32 %v2416, %v2486
        %2488 = vdwg.mxu0
        %v2493 = vcombine.low %v1917, %v1919
        %v2494 = vcombine.low %v2485, %v2487
        %v2497 = vadd.f32 %v295, %v2493
        %v2498 = vadd.f32 %v296, %v2494
        %2499 = vst [vmem:[%s261] sm:$0xff] %v2497
        %2500 = vst [vmem:[%s261 + $0x8] sm:$0xff] %v2498
        %s2501 = sand.u32 %s121, 1
        %s2502 = scalar_lea.sflag [#allocation4], %s2501
        %s2503 = sand.u32 %s121, 1
        %s2504 = smul.addr %s2503, 16
        %s2505 = scalar_lea.vmem [#allocation8], %s2504
        // Predicated region
        $region49: #{tpu_custom_call.1} parent=31 // pred_check
          %p2506 = pneg %p131
        $region50: #{tpu_custom_call.1} parent=31 // pred_check_branch
          %2508 = sbr.rel (%p2506) target = $region52
        $region51: #{tpu_custom_call.1} parent=31 // pred_region
          %s2509 = smul.u32 4, %s25
          %s2511 = ssub.s32 256, 256
          %2512 = vsyncadd %s2502, %s2511
          %s2513 = smul.addr %s2509, 64
          %s2514 = scalar_lea.hbm %s3, %s2513
          %s2516 = sshll.u32 %s2505, 4
          %s2517 = int_to_ptr.vmem [resolvable:$true] %s2516
          %2519 = dma.vmem_to_hbm [thread:$0]  %s2517, 256, %s2514, %s2502
        $region52: #{tpu_custom_call.1} parent=31 // pred_fallthru
          _
      $region32: #{tpu_custom_call.1} parent=5 // pred_fallthru
        _
      %p2520 = scmp.le.s32.totalorder 2, %s16
      // Predicated region
      $region53: #{tpu_custom_call.1} parent=5 // pred_check
        %p2521 = pneg %p2520
      $region54: #{tpu_custom_call.1} parent=5 // pred_check_branch
        %2523 = sbr.rel (%p2521) target = $region56
      $region55: #{tpu_custom_call.1} parent=5 // pred_region
        %s2524 = ssub.s32 %s16, 2
        // Predicated region
        $region57: #{tpu_custom_call.1} parent=55 // pred_check
          %p2525 = pneg %p137
        $region58: #{tpu_custom_call.1} parent=55 // pred_check_branch
          %2527 = sbr.rel (%p2525) target = $region60
        $region59: #{tpu_custom_call.1} parent=55 // pred_region
          %s2528 = sand.u32 %s122, 1
          %s2529 = scalar_lea.sflag [#allocation4], %s2528
          %s2530 = sand.u32 %s122, 1
          %s2531 = smul.addr %s2530, 16
          %s2532 = scalar_lea.vmem [#allocation8], %s2531
          %2533 = dma.done %s2529, 256
        $region60: #{tpu_custom_call.1} parent=55 // pred_fallthru
          _
      $region56: #{tpu_custom_call.1} parent=5 // pred_fallthru
        _
    $region6: #{tpu_custom_call.1} parent=1 // loop_footer
      %s20 = sadd.s32 1, %s16
    $region7: #{tpu_custom_call.1} parent=1 // loop_footer_branch
      %15 = sbr.rel target = $region3
    $region8: #{tpu_custom_call.1} parent=1 // loop_exit
      _
    %2534 = vsyncpa [#allocation3], 1
    %s2535 = scalar_lea.sflag [#allocation3], 1
    %2536 = vsyncpa %s2535, 1
    %2537 = vsyncpa [#allocation6], 1
    %s2538 = scalar_lea.sflag [#allocation6], 1
    %2539 = vsyncpa %s2538, 1
    %2540 = vsyncpa [#allocation4], 1
    %s2541 = scalar_lea.sflag [#allocation4], 1
    %2542 = vsyncpa %s2541, 1

</llo_original>
